<compile_context>
chip_gen: v7x
topology: tpu7x:2x2x1
jax: 0.10.0
libtpu: 0.0.40
codegen_flags: <defaults>
</compile_context>

<pallas_src>
import jax
import jax.numpy as jnp
from jax import lax
from jax.experimental import pallas as pl
from jax.experimental.pallas import tpu as pltpu

FEATURE_NUM = 66   # fixed in the PyTorch module
HIDDEN = 8
BN_EPS = 1e-5


def bigru_kernel(
    x_ref,                                    # (T, B_tile, F)
    wif_ref, whf_ref, bif_ref, bhnf_ref,      # fwd GRU packed: (F,3H) (H,3H) (1,3H) (1,H)
    wib_ref, bib_ref, bhnb_ref,               # bwd GRU packed (no Wh needed, h0=0)
    w1f_ref, w1b_ref, b1_ref,                 # FC1 (BN1 folded), split fwd/bwd halves
    w2_ref, b2_ref,                           # FC2 (BN2 folded)
    w3_ref, b3_ref,                           # FC3 (lane-padded)
    out_ref,                                  # (B_tile, N_pad)
):
    T, Bt, _ = x_ref.shape
    H = whf_ref.shape[0]
    f32 = jnp.float32

    # Hoist weight loads out of the unrolled time loop.
    wif = wif_ref[...]
    whf = whf_ref[...]
    bif = bif_ref[...]       # already contains bh_r / bh_z folded in
    bhnf = bhnf_ref[...]

    # ---- forward direction: full scan over time (fully unrolled, static T) ----
    h = jnp.zeros((Bt, H), f32)
    for t in range(T):
        # packed input projection: one (Bt,66)@(66,24) dot, independent of h,
        # so after unrolling it overlaps with the previous step's recurrence.
        gi = jnp.dot(x_ref[t], wif, preferred_element_type=f32) + bif     # (Bt, 3H)
        gh = jnp.dot(h, whf, preferred_element_type=f32)                  # (Bt, 3H)
        r = jax.nn.sigmoid(gi[:, :H] + gh[:, :H])
        z = jax.nn.sigmoid(gi[:, H:2 * H] + gh[:, H:2 * H])
        n = jnp.tanh(gi[:, 2 * H:] + r * (gh[:, 2 * H:] + bhnf))
        h = (1.0 - z) * n + z * h
    h_fwd = h

    # ---- reverse direction: GruOut[:, -1, H:] == one cell step on x[T-1] from
    # h0 = 0, hence gh == bh and h' = (1 - z) * n. Only one packed input dot.
    gib = jnp.dot(x_ref[T - 1], wib_ref[...], preferred_element_type=f32) + bib_ref[...]
    rb = jax.nn.sigmoid(gib[:, :H])
    zb = jax.nn.sigmoid(gib[:, H:2 * H])
    nb = jnp.tanh(gib[:, 2 * H:] + rb * bhnb_ref[...])
    h_bwd = (1.0 - zb) * nb

    # ---- PrdFC head: BN folded into W/b (eval), dropout = identity ----
    # concat(h_fwd, h_bwd) @ W1 done as two split matmuls (no lane concat).
    y = (jnp.dot(h_fwd, w1f_ref[...], preferred_element_type=f32)
         + jnp.dot(h_bwd, w1b_ref[...], preferred_element_type=f32)
         + b1_ref[...])
    y = jnp.maximum(y, 0.0)
    y = jnp.maximum(jnp.dot(y, w2_ref[...], preferred_element_type=f32) + b2_ref[...], 0.0)
    y = jnp.dot(y, w3_ref[...], preferred_element_type=f32) + b3_ref[...]
    out_ref[...] = y.astype(out_ref.dtype)


def _pack_gru(wi, wh, bi, bh):
    """Pack per-gate [r,z,n] GRU params into lane-dense 2-D slabs.

    wi: (3,F,H), wh: (3,H,H), bi/bh: (3,1,H)  ->
    Wi (F,3H), Wh (H,3H), bias (1,3H) with bh folded in for r/z, bh_n (1,H).
    """
    wi_p = jnp.concatenate([wi[0], wi[1], wi[2]], axis=1)
    wh_p = jnp.concatenate([wh[0], wh[1], wh[2]], axis=1)
    bi_p = jnp.concatenate([bi[0] + bh[0], bi[1] + bh[1], bi[2]], axis=1)
    return wi_p, wh_p, bi_p, bh[2]


def _fold_bn(w, b, g, be, m, v):
    """Fold eval-mode BatchNorm1d into the preceding Linear."""
    s = g * lax.rsqrt(v + BN_EPS)              # (1, C)
    return w * s, (b - m) * s + be


def bigru_forward(x, params):
    """x: (B, T, 66) float32, PyTorch batch_first layout."""
    B, T, F = x.shape
    assert F == FEATURE_NUM
    x_tbf = jnp.transpose(x, (1, 0, 2)).astype(jnp.float32)   # kernel layout (T, B, F)

    # ---- pack GRU gate weights into lane-dense 2-D slabs (wrapper-side) ----
    wif, whf, bif, bhnf = _pack_gru(params["wif"], params["whf"],
                                    params["bif"], params["bhf"])
    wib, _whb, bib, bhnb = _pack_gru(params["wib"], params["whb"],
                                     params["bib"], params["bhb"])   # Wh_bwd unused (h0=0)

    # ---- fold eval-mode BatchNorm into the Linear layers ----
    w1, b1 = _fold_bn(params["w1"], params["b1"], params["g1"],
                      params["be1"], params["m1"], params["v1"])
    w2, b2 = _fold_bn(params["w2"], params["b2"], params["g2"],
                      params["be2"], params["m2"], params["v2"])
    w1f, w1b = w1[:HIDDEN], w1[HIDDEN:]

    # ---- pad tiny output dim to a lane-dense 128-wide slab ----
    num_output = params["w3"].shape[1]
    n_pad = ((num_output + 127) // 128) * 128
    w3 = jnp.zeros((w2.shape[1], n_pad), jnp.float32).at[:, :num_output].set(params["w3"])
    b3 = jnp.zeros((1, n_pad), jnp.float32).at[:, :num_output].set(params["b3"])

    # ---- batch grid: parallel across cores, bounds VMEM at large B ----
    b_tile = B if B <= 256 else 256
    n_blocks = pl.cdiv(B, b_tile)
    b_padded = n_blocks * b_tile
    if b_padded != B:
        x_tbf = jnp.pad(x_tbf, ((0, 0), (0, b_padded - B), (0, 0)))

    weights = (wif, whf, bif, bhnf, wib, bib, bhnb,
               w1f, w1b, b1, w2, b2, w3, b3)
    w_specs = [pl.BlockSpec(w.shape, lambda i: (0, 0)) for w in weights]

    grid_spec = pltpu.PrefetchScalarGridSpec(
        num_scalar_prefetch=0,
        grid=(n_blocks,),
        in_specs=[pl.BlockSpec((T, b_tile, FEATURE_NUM), lambda i: (0, i, 0))] + w_specs,
        out_specs=pl.BlockSpec((b_tile, n_pad), lambda i: (i, 0)),
    )

    out = pl.pallas_call(
        bigru_kernel,
        out_shape=jax.ShapeDtypeStruct((b_padded, n_pad), jnp.float32),
        grid_spec=grid_spec,
        compiler_params=pltpu.CompilerParams(
            dimension_semantics=("parallel",),
            vmem_limit_bytes=32 * 1024 * 1024,   # headroom beyond v5e's 16 MiB default
        ),
    )(x_tbf, *weights)
    return out[:B, :num_output]


def bigru_reference(x, params):
    """Pure-JAX reference of the same eval-mode forward pass (unpacked params)."""
    B, T, F = x.shape

    def cell(xt, h, wi, wh, bi, bh):
        gi = [xt @ wi[i] + bi[i] for i in range(3)]
        gh = [h @ wh[i] + bh[i] for i in range(3)]
        r = jax.nn.sigmoid(gi[0] + gh[0])
        z = jax.nn.sigmoid(gi[1] + gh[1])
        n = jnp.tanh(gi[2] + r * gh[2])
        return (1.0 - z) * n + z * h

    h = jnp.zeros((B, HIDDEN), jnp.float32)
    for t in range(T):
        h = cell(x[:, t, :], h, params["wif"], params["whf"], params["bif"], params["bhf"])
    hb = cell(x[:, T - 1, :], jnp.zeros((B, HIDDEN), jnp.float32),
              params["wib"], params["whb"], params["bib"], params["bhb"])
    feat = jnp.concatenate([h, hb], axis=-1)

    def bn(y, g, be, m, v):
        return (y - m) * lax.rsqrt(v + BN_EPS) * g + be

    y = feat @ params["w1"] + params["b1"]
    y = jnp.maximum(bn(y, params["g1"], params["be1"], params["m1"], params["v1"]), 0.0)
    y = y @ params["w2"] + params["b2"]
    y = jnp.maximum(bn(y, params["g2"], params["be2"], params["m2"], params["v2"]), 0.0)
    return y @ params["w3"] + params["b3"]


def init_params(key, num_output):
    ks = jax.random.split(key, 14)

    def u(k, shape, scale):
        return jax.random.uniform(k, shape, jnp.float32, -scale, scale)

    kg = 1.0 / float(jnp.sqrt(jnp.float32(HIDDEN)))
    k1 = 1.0 / float(jnp.sqrt(jnp.float32(2 * HIDDEN)))   # fan_in = 16
    k2 = 1.0 / float(jnp.sqrt(jnp.float32(64)))
    p = {}
    # GRU weights, gate order [r, z, n], stored as (gate, in, hidden)
    p["wif"] = u(ks[0], (3, FEATURE_NUM, HIDDEN), kg)
    p["whf"] = u(ks[1], (3, HIDDEN, HIDDEN), kg)
    p["bif"] = u(ks[2], (3, 1, HIDDEN), kg)
    p["bhf"] = u(ks[3], (3, 1, HIDDEN), kg)
    p["wib"] = u(ks[4], (3, FEATURE_NUM, HIDDEN), kg)
    p["whb"] = u(ks[5], (3, HIDDEN, HIDDEN), kg)
    p["bib"] = u(ks[6], (3, 1, HIDDEN), kg)
    p["bhb"] = u(ks[7], (3, 1, HIDDEN), kg)
    # PrdFC
    p["w1"] = u(ks[8], (2 * HIDDEN, 64), k1)
    p["b1"] = u(ks[9], (1, 64), k1)
    p["g1"] = jnp.ones((1, 64), jnp.float32)
    p["be1"] = jnp.zeros((1, 64), jnp.float32)
    p["m1"] = jnp.zeros((1, 64), jnp.float32)
    p["v1"] = jnp.ones((1, 64), jnp.float32)
    p["w2"] = u(ks[10], (64, 64), k2)
    p["b2"] = u(ks[11], (1, 64), k2)
    p["g2"] = jnp.ones((1, 64), jnp.float32)
    p["be2"] = jnp.zeros((1, 64), jnp.float32)
    p["m2"] = jnp.zeros((1, 64), jnp.float32)
    p["v2"] = jnp.ones((1, 64), jnp.float32)
    p["w3"] = u(ks[12], (64, num_output), k2)
    p["b3"] = u(ks[13], (1, num_output), k2)
    return p


if __name__ == "__main__":
    B, T, NUM_OUTPUT = 2, 8, 5          # featureSize = T * 66 conceptually
    key = jax.random.PRNGKey(0)
    k_param, k_x = jax.random.split(key)

    params = init_params(k_param, NUM_OUTPUT)
    x = jax.random.normal(k_x, (B, T, FEATURE_NUM), jnp.float32)

    out = bigru_forward(x, params)
    out = jax.block_until_ready(out)

    ref = jax.block_until_ready(bigru_reference(x, params))
    assert out.shape == (B, NUM_OUTPUT), out.shape
    assert jnp.allclose(out, ref, rtol=1e-2, atol=1e-2), (out, ref)

    print("KERNEL_OK")
</pallas_src>

<mosaic_0001>
module attributes {stable_mosaic.version = 11 : i64} {
  func.func @bigru_kernel(%arg0: i32, %arg1: memref<8x2x66xf32, #tpu.memory_space<vmem>>, %arg2: memref<66x24xf32, #tpu.memory_space<vmem>>, %arg3: memref<8x24xf32, #tpu.memory_space<vmem>>, %arg4: memref<1x24xf32, #tpu.memory_space<vmem>>, %arg5: memref<1x8xf32, #tpu.memory_space<vmem>>, %arg6: memref<66x24xf32, #tpu.memory_space<vmem>>, %arg7: memref<1x24xf32, #tpu.memory_space<vmem>>, %arg8: memref<1x8xf32, #tpu.memory_space<vmem>>, %arg9: memref<8x64xf32, #tpu.memory_space<vmem>>, %arg10: memref<8x64xf32, #tpu.memory_space<vmem>>, %arg11: memref<1x64xf32, #tpu.memory_space<vmem>>, %arg12: memref<64x64xf32, #tpu.memory_space<vmem>>, %arg13: memref<1x64xf32, #tpu.memory_space<vmem>>, %arg14: memref<64x128xf32, #tpu.memory_space<vmem>>, %arg15: memref<1x128xf32, #tpu.memory_space<vmem>>, %arg16: memref<2x128xf32, #tpu.memory_space<vmem>>) attributes {dimension_semantics = [#tpu.dimension_semantics<parallel>], iteration_bounds = array<i64: 1>, scalar_prefetch = 0 : i64, scratch_operands = 0 : i64, tpu.core_type = #tpu.core_type<tc>, window_params = [{transform_indices = @transform_0, window_bounds = array<i64: 8, 2, 66>}, {pipeline_mode = #tpu.pipeline_mode<synchronous>, transform_indices = @transform_1, window_bounds = array<i64: 66, 24>}, {pipeline_mode = #tpu.pipeline_mode<synchronous>, transform_indices = @transform_2, window_bounds = array<i64: 8, 24>}, {pipeline_mode = #tpu.pipeline_mode<synchronous>, transform_indices = @transform_3, window_bounds = array<i64: 1, 24>}, {pipeline_mode = #tpu.pipeline_mode<synchronous>, transform_indices = @transform_4, window_bounds = array<i64: 1, 8>}, {pipeline_mode = #tpu.pipeline_mode<synchronous>, transform_indices = @transform_5, window_bounds = array<i64: 66, 24>}, {pipeline_mode = #tpu.pipeline_mode<synchronous>, transform_indices = @transform_6, window_bounds = array<i64: 1, 24>}, {pipeline_mode = #tpu.pipeline_mode<synchronous>, transform_indices = @transform_7, window_bounds = array<i64: 1, 8>}, {pipeline_mode = #tpu.pipeline_mode<synchronous>, transform_indices = @transform_8, window_bounds = array<i64: 8, 64>}, {pipeline_mode = #tpu.pipeline_mode<synchronous>, transform_indices = @transform_9, window_bounds = array<i64: 8, 64>}, {pipeline_mode = #tpu.pipeline_mode<synchronous>, transform_indices = @transform_10, window_bounds = array<i64: 1, 64>}, {pipeline_mode = #tpu.pipeline_mode<synchronous>, transform_indices = @transform_11, window_bounds = array<i64: 64, 64>}, {pipeline_mode = #tpu.pipeline_mode<synchronous>, transform_indices = @transform_12, window_bounds = array<i64: 1, 64>}, {pipeline_mode = #tpu.pipeline_mode<synchronous>, transform_indices = @transform_13, window_bounds = array<i64: 64, 128>}, {pipeline_mode = #tpu.pipeline_mode<synchronous>, transform_indices = @transform_14, window_bounds = array<i64: 1, 128>}, {transform_indices = @transform_15, window_bounds = array<i64: 2, 128>}]} {
    %c0 = arith.constant 0 : index
    %c0_0 = arith.constant 0 : index
    %0 = vector.load %arg2[%c0, %c0_0] : memref<66x24xf32, #tpu.memory_space<vmem>>, vector<66x24xf32>
    %c0_1 = arith.constant 0 : index
    %c0_2 = arith.constant 0 : index
    %1 = vector.load %arg3[%c0_1, %c0_2] : memref<8x24xf32, #tpu.memory_space<vmem>>, vector<8x24xf32>
    %c0_3 = arith.constant 0 : index
    %c0_4 = arith.constant 0 : index
    %2 = vector.load %arg4[%c0_3, %c0_4] : memref<1x24xf32, #tpu.memory_space<vmem>>, vector<1x24xf32>
    %c0_5 = arith.constant 0 : index
    %c0_6 = arith.constant 0 : index
    %3 = vector.load %arg5[%c0_5, %c0_6] : memref<1x8xf32, #tpu.memory_space<vmem>>, vector<1x8xf32>
    %cst = arith.constant 0.000000e+00 : f32
    %4 = vector.broadcast %cst : f32 to vector<2x8xf32>
    %c0_7 = arith.constant 0 : index
    %c0_8 = arith.constant 0 : index
    %c0_9 = arith.constant 0 : index
    %5 = vector.load %arg1[%c0_7, %c0_8, %c0_9] : memref<8x2x66xf32, #tpu.memory_space<vmem>>, vector<1x2x66xf32>
    %6 = vector.shape_cast %5 : vector<1x2x66xf32> to vector<2x66xf32>
    %cst_10 = arith.constant dense<0.000000e+00> : vector<2x24xf32>
    %7 = tpu.matmul %6, %0, %cst_10 {dimension_numbers = #tpu.dot_dimension_numbers<[1], [0], [0], [1], [0, 0, 1, 1], [], []>} : vector<2x66xf32>, vector<66x24xf32>, vector<2x24xf32> -> vector<2x24xf32>
    %8 = vector.broadcast %2 : vector<1x24xf32> to vector<2x24xf32>
    %9 = arith.addf %7, %8 : vector<2x24xf32>
    %cst_11 = arith.constant dense<0.000000e+00> : vector<2x24xf32>
    %10 = tpu.matmul %4, %1, %cst_11 {dimension_numbers = #tpu.dot_dimension_numbers<[1], [0], [0], [1], [0, 0, 1, 1], [], []>} : vector<2x8xf32>, vector<8x24xf32>, vector<2x24xf32> -> vector<2x24xf32>
    %11 = vector.extract_strided_slice %9 {offsets = [0, 0], sizes = [2, 8], strides = [1, 1]} : vector<2x24xf32> to vector<2x8xf32>
    %12 = vector.extract_strided_slice %10 {offsets = [0, 0], sizes = [2, 8], strides = [1, 1]} : vector<2x24xf32> to vector<2x8xf32>
    %13 = arith.addf %11, %12 : vector<2x8xf32>
    %14 = arith.negf %13 : vector<2x8xf32>
    %15 = math.exp %14 : vector<2x8xf32>
    %cst_12 = arith.constant 1.000000e+00 : f32
    %16 = vector.broadcast %cst_12 : f32 to vector<2x8xf32>
    %17 = arith.addf %16, %15 : vector<2x8xf32>
    %18 = arith.divf %16, %17 : vector<2x8xf32>
    %19 = vector.extract_strided_slice %9 {offsets = [0, 8], sizes = [2, 8], strides = [1, 1]} : vector<2x24xf32> to vector<2x8xf32>
    %20 = vector.extract_strided_slice %10 {offsets = [0, 8], sizes = [2, 8], strides = [1, 1]} : vector<2x24xf32> to vector<2x8xf32>
    %21 = arith.addf %19, %20 : vector<2x8xf32>
    %22 = arith.negf %21 : vector<2x8xf32>
    %23 = math.exp %22 : vector<2x8xf32>
    %cst_13 = arith.constant 1.000000e+00 : f32
    %24 = vector.broadcast %cst_13 : f32 to vector<2x8xf32>
    %25 = arith.addf %24, %23 : vector<2x8xf32>
    %26 = arith.divf %24, %25 : vector<2x8xf32>
    %27 = vector.extract_strided_slice %9 {offsets = [0, 16], sizes = [2, 8], strides = [1, 1]} : vector<2x24xf32> to vector<2x8xf32>
    %28 = vector.extract_strided_slice %10 {offsets = [0, 16], sizes = [2, 8], strides = [1, 1]} : vector<2x24xf32> to vector<2x8xf32>
    %29 = vector.broadcast %3 : vector<1x8xf32> to vector<2x8xf32>
    %30 = arith.addf %28, %29 : vector<2x8xf32>
    %31 = arith.mulf %18, %30 : vector<2x8xf32>
    %32 = arith.addf %27, %31 : vector<2x8xf32>
    %33 = math.tanh %32 : vector<2x8xf32>
    %cst_14 = arith.constant 1.000000e+00 : f32
    %34 = vector.broadcast %cst_14 : f32 to vector<2x8xf32>
    %35 = arith.subf %34, %26 : vector<2x8xf32>
    %36 = arith.mulf %35, %33 : vector<2x8xf32>
    %37 = arith.mulf %26, %4 : vector<2x8xf32>
    %38 = arith.addf %36, %37 : vector<2x8xf32>
    %c1 = arith.constant 1 : index
    %c0_15 = arith.constant 0 : index
    %c0_16 = arith.constant 0 : index
    %39 = vector.load %arg1[%c1, %c0_15, %c0_16] : memref<8x2x66xf32, #tpu.memory_space<vmem>>, vector<1x2x66xf32>
    %40 = vector.shape_cast %39 : vector<1x2x66xf32> to vector<2x66xf32>
    %cst_17 = arith.constant dense<0.000000e+00> : vector<2x24xf32>
    %41 = tpu.matmul %40, %0, %cst_17 {dimension_numbers = #tpu.dot_dimension_numbers<[1], [0], [0], [1], [0, 0, 1, 1], [], []>} : vector<2x66xf32>, vector<66x24xf32>, vector<2x24xf32> -> vector<2x24xf32>
    %42 = vector.broadcast %2 : vector<1x24xf32> to vector<2x24xf32>
    %43 = arith.addf %41, %42 : vector<2x24xf32>
    %cst_18 = arith.constant dense<0.000000e+00> : vector<2x24xf32>
    %44 = tpu.matmul %38, %1, %cst_18 {dimension_numbers = #tpu.dot_dimension_numbers<[1], [0], [0], [1], [0, 0, 1, 1], [], []>} : vector<2x8xf32>, vector<8x24xf32>, vector<2x24xf32> -> vector<2x24xf32>
    %45 = vector.extract_strided_slice %43 {offsets = [0, 0], sizes = [2, 8], strides = [1, 1]} : vector<2x24xf32> to vector<2x8xf32>
    %46 = vector.extract_strided_slice %44 {offsets = [0, 0], sizes = [2, 8], strides = [1, 1]} : vector<2x24xf32> to vector<2x8xf32>
    %47 = arith.addf %45, %46 : vector<2x8xf32>
    %48 = arith.negf %47 : vector<2x8xf32>
    %49 = math.exp %48 : vector<2x8xf32>
    %cst_19 = arith.constant 1.000000e+00 : f32
    %50 = vector.broadcast %cst_19 : f32 to vector<2x8xf32>
    %51 = arith.addf %50, %49 : vector<2x8xf32>
    %52 = arith.divf %50, %51 : vector<2x8xf32>
    %53 = vector.extract_strided_slice %43 {offsets = [0, 8], sizes = [2, 8], strides = [1, 1]} : vector<2x24xf32> to vector<2x8xf32>
    %54 = vector.extract_strided_slice %44 {offsets = [0, 8], sizes = [2, 8], strides = [1, 1]} : vector<2x24xf32> to vector<2x8xf32>
    %55 = arith.addf %53, %54 : vector<2x8xf32>
    %56 = arith.negf %55 : vector<2x8xf32>
    %57 = math.exp %56 : vector<2x8xf32>
    %cst_20 = arith.constant 1.000000e+00 : f32
    %58 = vector.broadcast %cst_20 : f32 to vector<2x8xf32>
    %59 = arith.addf %58, %57 : vector<2x8xf32>
    %60 = arith.divf %58, %59 : vector<2x8xf32>
    %61 = vector.extract_strided_slice %43 {offsets = [0, 16], sizes = [2, 8], strides = [1, 1]} : vector<2x24xf32> to vector<2x8xf32>
    %62 = vector.extract_strided_slice %44 {offsets = [0, 16], sizes = [2, 8], strides = [1, 1]} : vector<2x24xf32> to vector<2x8xf32>
    %63 = vector.broadcast %3 : vector<1x8xf32> to vector<2x8xf32>
    %64 = arith.addf %62, %63 : vector<2x8xf32>
    %65 = arith.mulf %52, %64 : vector<2x8xf32>
    %66 = arith.addf %61, %65 : vector<2x8xf32>
    %67 = math.tanh %66 : vector<2x8xf32>
    %cst_21 = arith.constant 1.000000e+00 : f32
    %68 = vector.broadcast %cst_21 : f32 to vector<2x8xf32>
    %69 = arith.subf %68, %60 : vector<2x8xf32>
    %70 = arith.mulf %69, %67 : vector<2x8xf32>
    %71 = arith.mulf %60, %38 : vector<2x8xf32>
    %72 = arith.addf %70, %71 : vector<2x8xf32>
    %c2 = arith.constant 2 : index
    %c0_22 = arith.constant 0 : index
    %c0_23 = arith.constant 0 : index
    %73 = vector.load %arg1[%c2, %c0_22, %c0_23] : memref<8x2x66xf32, #tpu.memory_space<vmem>>, vector<1x2x66xf32>
    %74 = vector.shape_cast %73 : vector<1x2x66xf32> to vector<2x66xf32>
    %cst_24 = arith.constant dense<0.000000e+00> : vector<2x24xf32>
    %75 = tpu.matmul %74, %0, %cst_24 {dimension_numbers = #tpu.dot_dimension_numbers<[1], [0], [0], [1], [0, 0, 1, 1], [], []>} : vector<2x66xf32>, vector<66x24xf32>, vector<2x24xf32> -> vector<2x24xf32>
    %76 = vector.broadcast %2 : vector<1x24xf32> to vector<2x24xf32>
    %77 = arith.addf %75, %76 : vector<2x24xf32>
    %cst_25 = arith.constant dense<0.000000e+00> : vector<2x24xf32>
    %78 = tpu.matmul %72, %1, %cst_25 {dimension_numbers = #tpu.dot_dimension_numbers<[1], [0], [0], [1], [0, 0, 1, 1], [], []>} : vector<2x8xf32>, vector<8x24xf32>, vector<2x24xf32> -> vector<2x24xf32>
    %79 = vector.extract_strided_slice %77 {offsets = [0, 0], sizes = [2, 8], strides = [1, 1]} : vector<2x24xf32> to vector<2x8xf32>
    %80 = vector.extract_strided_slice %78 {offsets = [0, 0], sizes = [2, 8], strides = [1, 1]} : vector<2x24xf32> to vector<2x8xf32>
    %81 = arith.addf %79, %80 : vector<2x8xf32>
    %82 = arith.negf %81 : vector<2x8xf32>
    %83 = math.exp %82 : vector<2x8xf32>
    %cst_26 = arith.constant 1.000000e+00 : f32
    %84 = vector.broadcast %cst_26 : f32 to vector<2x8xf32>
    %85 = arith.addf %84, %83 : vector<2x8xf32>
    %86 = arith.divf %84, %85 : vector<2x8xf32>
    %87 = vector.extract_strided_slice %77 {offsets = [0, 8], sizes = [2, 8], strides = [1, 1]} : vector<2x24xf32> to vector<2x8xf32>
    %88 = vector.extract_strided_slice %78 {offsets = [0, 8], sizes = [2, 8], strides = [1, 1]} : vector<2x24xf32> to vector<2x8xf32>
    %89 = arith.addf %87, %88 : vector<2x8xf32>
    %90 = arith.negf %89 : vector<2x8xf32>
    %91 = math.exp %90 : vector<2x8xf32>
    %cst_27 = arith.constant 1.000000e+00 : f32
    %92 = vector.broadcast %cst_27 : f32 to vector<2x8xf32>
    %93 = arith.addf %92, %91 : vector<2x8xf32>
    %94 = arith.divf %92, %93 : vector<2x8xf32>
    %95 = vector.extract_strided_slice %77 {offsets = [0, 16], sizes = [2, 8], strides = [1, 1]} : vector<2x24xf32> to vector<2x8xf32>
    %96 = vector.extract_strided_slice %78 {offsets = [0, 16], sizes = [2, 8], strides = [1, 1]} : vector<2x24xf32> to vector<2x8xf32>
    %97 = vector.broadcast %3 : vector<1x8xf32> to vector<2x8xf32>
    %98 = arith.addf %96, %97 : vector<2x8xf32>
    %99 = arith.mulf %86, %98 : vector<2x8xf32>
    %100 = arith.addf %95, %99 : vector<2x8xf32>
    %101 = math.tanh %100 : vector<2x8xf32>
    %cst_28 = arith.constant 1.000000e+00 : f32
    %102 = vector.broadcast %cst_28 : f32 to vector<2x8xf32>
    %103 = arith.subf %102, %94 : vector<2x8xf32>
    %104 = arith.mulf %103, %101 : vector<2x8xf32>
    %105 = arith.mulf %94, %72 : vector<2x8xf32>
    %106 = arith.addf %104, %105 : vector<2x8xf32>
    %c3 = arith.constant 3 : index
    %c0_29 = arith.constant 0 : index
    %c0_30 = arith.constant 0 : index
    %107 = vector.load %arg1[%c3, %c0_29, %c0_30] : memref<8x2x66xf32, #tpu.memory_space<vmem>>, vector<1x2x66xf32>
    %108 = vector.shape_cast %107 : vector<1x2x66xf32> to vector<2x66xf32>
    %cst_31 = arith.constant dense<0.000000e+00> : vector<2x24xf32>
    %109 = tpu.matmul %108, %0, %cst_31 {dimension_numbers = #tpu.dot_dimension_numbers<[1], [0], [0], [1], [0, 0, 1, 1], [], []>} : vector<2x66xf32>, vector<66x24xf32>, vector<2x24xf32> -> vector<2x24xf32>
    %110 = vector.broadcast %2 : vector<1x24xf32> to vector<2x24xf32>
    %111 = arith.addf %109, %110 : vector<2x24xf32>
    %cst_32 = arith.constant dense<0.000000e+00> : vector<2x24xf32>
    %112 = tpu.matmul %106, %1, %cst_32 {dimension_numbers = #tpu.dot_dimension_numbers<[1], [0], [0], [1], [0, 0, 1, 1], [], []>} : vector<2x8xf32>, vector<8x24xf32>, vector<2x24xf32> -> vector<2x24xf32>
    %113 = vector.extract_strided_slice %111 {offsets = [0, 0], sizes = [2, 8], strides = [1, 1]} : vector<2x24xf32> to vector<2x8xf32>
    %114 = vector.extract_strided_slice %112 {offsets = [0, 0], sizes = [2, 8], strides = [1, 1]} : vector<2x24xf32> to vector<2x8xf32>
    %115 = arith.addf %113, %114 : vector<2x8xf32>
    %116 = arith.negf %115 : vector<2x8xf32>
    %117 = math.exp %116 : vector<2x8xf32>
    %cst_33 = arith.constant 1.000000e+00 : f32
    %118 = vector.broadcast %cst_33 : f32 to vector<2x8xf32>
    %119 = arith.addf %118, %117 : vector<2x8xf32>
    %120 = arith.divf %118, %119 : vector<2x8xf32>
    %121 = vector.extract_strided_slice %111 {offsets = [0, 8], sizes = [2, 8], strides = [1, 1]} : vector<2x24xf32> to vector<2x8xf32>
    %122 = vector.extract_strided_slice %112 {offsets = [0, 8], sizes = [2, 8], strides = [1, 1]} : vector<2x24xf32> to vector<2x8xf32>
    %123 = arith.addf %121, %122 : vector<2x8xf32>
    %124 = arith.negf %123 : vector<2x8xf32>
    %125 = math.exp %124 : vector<2x8xf32>
    %cst_34 = arith.constant 1.000000e+00 : f32
    %126 = vector.broadcast %cst_34 : f32 to vector<2x8xf32>
    %127 = arith.addf %126, %125 : vector<2x8xf32>
    %128 = arith.divf %126, %127 : vector<2x8xf32>
    %129 = vector.extract_strided_slice %111 {offsets = [0, 16], sizes = [2, 8], strides = [1, 1]} : vector<2x24xf32> to vector<2x8xf32>
    %130 = vector.extract_strided_slice %112 {offsets = [0, 16], sizes = [2, 8], strides = [1, 1]} : vector<2x24xf32> to vector<2x8xf32>
    %131 = vector.broadcast %3 : vector<1x8xf32> to vector<2x8xf32>
    %132 = arith.addf %130, %131 : vector<2x8xf32>
    %133 = arith.mulf %120, %132 : vector<2x8xf32>
    %134 = arith.addf %129, %133 : vector<2x8xf32>
    %135 = math.tanh %134 : vector<2x8xf32>
    %cst_35 = arith.constant 1.000000e+00 : f32
    %136 = vector.broadcast %cst_35 : f32 to vector<2x8xf32>
    %137 = arith.subf %136, %128 : vector<2x8xf32>
    %138 = arith.mulf %137, %135 : vector<2x8xf32>
    %139 = arith.mulf %128, %106 : vector<2x8xf32>
    %140 = arith.addf %138, %139 : vector<2x8xf32>
    %c4 = arith.constant 4 : index
    %c0_36 = arith.constant 0 : index
    %c0_37 = arith.constant 0 : index
    %141 = vector.load %arg1[%c4, %c0_36, %c0_37] : memref<8x2x66xf32, #tpu.memory_space<vmem>>, vector<1x2x66xf32>
    %142 = vector.shape_cast %141 : vector<1x2x66xf32> to vector<2x66xf32>
    %cst_38 = arith.constant dense<0.000000e+00> : vector<2x24xf32>
    %143 = tpu.matmul %142, %0, %cst_38 {dimension_numbers = #tpu.dot_dimension_numbers<[1], [0], [0], [1], [0, 0, 1, 1], [], []>} : vector<2x66xf32>, vector<66x24xf32>, vector<2x24xf32> -> vector<2x24xf32>
    %144 = vector.broadcast %2 : vector<1x24xf32> to vector<2x24xf32>
    %145 = arith.addf %143, %144 : vector<2x24xf32>
    %cst_39 = arith.constant dense<0.000000e+00> : vector<2x24xf32>
    %146 = tpu.matmul %140, %1, %cst_39 {dimension_numbers = #tpu.dot_dimension_numbers<[1], [0], [0], [1], [0, 0, 1, 1], [], []>} : vector<2x8xf32>, vector<8x24xf32>, vector<2x24xf32> -> vector<2x24xf32>
    %147 = vector.extract_strided_slice %145 {offsets = [0, 0], sizes = [2, 8], strides = [1, 1]} : vector<2x24xf32> to vector<2x8xf32>
    %148 = vector.extract_strided_slice %146 {offsets = [0, 0], sizes = [2, 8], strides = [1, 1]} : vector<2x24xf32> to vector<2x8xf32>
    %149 = arith.addf %147, %148 : vector<2x8xf32>
    %150 = arith.negf %149 : vector<2x8xf32>
    %151 = math.exp %150 : vector<2x8xf32>
    %cst_40 = arith.constant 1.000000e+00 : f32
    %152 = vector.broadcast %cst_40 : f32 to vector<2x8xf32>
    %153 = arith.addf %152, %151 : vector<2x8xf32>
    %154 = arith.divf %152, %153 : vector<2x8xf32>
    %155 = vector.extract_strided_slice %145 {offsets = [0, 8], sizes = [2, 8], strides = [1, 1]} : vector<2x24xf32> to vector<2x8xf32>
    %156 = vector.extract_strided_slice %146 {offsets = [0, 8], sizes = [2, 8], strides = [1, 1]} : vector<2x24xf32> to vector<2x8xf32>
    %157 = arith.addf %155, %156 : vector<2x8xf32>
    %158 = arith.negf %157 : vector<2x8xf32>
    %159 = math.exp %158 : vector<2x8xf32>
    %cst_41 = arith.constant 1.000000e+00 : f32
    %160 = vector.broadcast %cst_41 : f32 to vector<2x8xf32>
    %161 = arith.addf %160, %159 : vector<2x8xf32>
    %162 = arith.divf %160, %161 : vector<2x8xf32>
    %163 = vector.extract_strided_slice %145 {offsets = [0, 16], sizes = [2, 8], strides = [1, 1]} : vector<2x24xf32> to vector<2x8xf32>
    %164 = vector.extract_strided_slice %146 {offsets = [0, 16], sizes = [2, 8], strides = [1, 1]} : vector<2x24xf32> to vector<2x8xf32>
    %165 = vector.broadcast %3 : vector<1x8xf32> to vector<2x8xf32>
    %166 = arith.addf %164, %165 : vector<2x8xf32>
    %167 = arith.mulf %154, %166 : vector<2x8xf32>
    %168 = arith.addf %163, %167 : vector<2x8xf32>
    %169 = math.tanh %168 : vector<2x8xf32>
    %cst_42 = arith.constant 1.000000e+00 : f32
    %170 = vector.broadcast %cst_42 : f32 to vector<2x8xf32>
    %171 = arith.subf %170, %162 : vector<2x8xf32>
    %172 = arith.mulf %171, %169 : vector<2x8xf32>
    %173 = arith.mulf %162, %140 : vector<2x8xf32>
    %174 = arith.addf %172, %173 : vector<2x8xf32>
    %c5 = arith.constant 5 : index
    %c0_43 = arith.constant 0 : index
    %c0_44 = arith.constant 0 : index
    %175 = vector.load %arg1[%c5, %c0_43, %c0_44] : memref<8x2x66xf32, #tpu.memory_space<vmem>>, vector<1x2x66xf32>
    %176 = vector.shape_cast %175 : vector<1x2x66xf32> to vector<2x66xf32>
    %cst_45 = arith.constant dense<0.000000e+00> : vector<2x24xf32>
    %177 = tpu.matmul %176, %0, %cst_45 {dimension_numbers = #tpu.dot_dimension_numbers<[1], [0], [0], [1], [0, 0, 1, 1], [], []>} : vector<2x66xf32>, vector<66x24xf32>, vector<2x24xf32> -> vector<2x24xf32>
    %178 = vector.broadcast %2 : vector<1x24xf32> to vector<2x24xf32>
    %179 = arith.addf %177, %178 : vector<2x24xf32>
    %cst_46 = arith.constant dense<0.000000e+00> : vector<2x24xf32>
    %180 = tpu.matmul %174, %1, %cst_46 {dimension_numbers = #tpu.dot_dimension_numbers<[1], [0], [0], [1], [0, 0, 1, 1], [], []>} : vector<2x8xf32>, vector<8x24xf32>, vector<2x24xf32> -> vector<2x24xf32>
    %181 = vector.extract_strided_slice %179 {offsets = [0, 0], sizes = [2, 8], strides = [1, 1]} : vector<2x24xf32> to vector<2x8xf32>
    %182 = vector.extract_strided_slice %180 {offsets = [0, 0], sizes = [2, 8], strides = [1, 1]} : vector<2x24xf32> to vector<2x8xf32>
    %183 = arith.addf %181, %182 : vector<2x8xf32>
    %184 = arith.negf %183 : vector<2x8xf32>
    %185 = math.exp %184 : vector<2x8xf32>
    %cst_47 = arith.constant 1.000000e+00 : f32
    %186 = vector.broadcast %cst_47 : f32 to vector<2x8xf32>
    %187 = arith.addf %186, %185 : vector<2x8xf32>
    %188 = arith.divf %186, %187 : vector<2x8xf32>
    %189 = vector.extract_strided_slice %179 {offsets = [0, 8], sizes = [2, 8], strides = [1, 1]} : vector<2x24xf32> to vector<2x8xf32>
    %190 = vector.extract_strided_slice %180 {offsets = [0, 8], sizes = [2, 8], strides = [1, 1]} : vector<2x24xf32> to vector<2x8xf32>
    %191 = arith.addf %189, %190 : vector<2x8xf32>
    %192 = arith.negf %191 : vector<2x8xf32>
    %193 = math.exp %192 : vector<2x8xf32>
    %cst_48 = arith.constant 1.000000e+00 : f32
    %194 = vector.broadcast %cst_48 : f32 to vector<2x8xf32>
    %195 = arith.addf %194, %193 : vector<2x8xf32>
    %196 = arith.divf %194, %195 : vector<2x8xf32>
    %197 = vector.extract_strided_slice %179 {offsets = [0, 16], sizes = [2, 8], strides = [1, 1]} : vector<2x24xf32> to vector<2x8xf32>
    %198 = vector.extract_strided_slice %180 {offsets = [0, 16], sizes = [2, 8], strides = [1, 1]} : vector<2x24xf32> to vector<2x8xf32>
    %199 = vector.broadcast %3 : vector<1x8xf32> to vector<2x8xf32>
    %200 = arith.addf %198, %199 : vector<2x8xf32>
    %201 = arith.mulf %188, %200 : vector<2x8xf32>
    %202 = arith.addf %197, %201 : vector<2x8xf32>
    %203 = math.tanh %202 : vector<2x8xf32>
    %cst_49 = arith.constant 1.000000e+00 : f32
    %204 = vector.broadcast %cst_49 : f32 to vector<2x8xf32>
    %205 = arith.subf %204, %196 : vector<2x8xf32>
    %206 = arith.mulf %205, %203 : vector<2x8xf32>
    %207 = arith.mulf %196, %174 : vector<2x8xf32>
    %208 = arith.addf %206, %207 : vector<2x8xf32>
    %c6 = arith.constant 6 : index
    %c0_50 = arith.constant 0 : index
    %c0_51 = arith.constant 0 : index
    %209 = vector.load %arg1[%c6, %c0_50, %c0_51] : memref<8x2x66xf32, #tpu.memory_space<vmem>>, vector<1x2x66xf32>
    %210 = vector.shape_cast %209 : vector<1x2x66xf32> to vector<2x66xf32>
    %cst_52 = arith.constant dense<0.000000e+00> : vector<2x24xf32>
    %211 = tpu.matmul %210, %0, %cst_52 {dimension_numbers = #tpu.dot_dimension_numbers<[1], [0], [0], [1], [0, 0, 1, 1], [], []>} : vector<2x66xf32>, vector<66x24xf32>, vector<2x24xf32> -> vector<2x24xf32>
    %212 = vector.broadcast %2 : vector<1x24xf32> to vector<2x24xf32>
    %213 = arith.addf %211, %212 : vector<2x24xf32>
    %cst_53 = arith.constant dense<0.000000e+00> : vector<2x24xf32>
    %214 = tpu.matmul %208, %1, %cst_53 {dimension_numbers = #tpu.dot_dimension_numbers<[1], [0], [0], [1], [0, 0, 1, 1], [], []>} : vector<2x8xf32>, vector<8x24xf32>, vector<2x24xf32> -> vector<2x24xf32>
    %215 = vector.extract_strided_slice %213 {offsets = [0, 0], sizes = [2, 8], strides = [1, 1]} : vector<2x24xf32> to vector<2x8xf32>
    %216 = vector.extract_strided_slice %214 {offsets = [0, 0], sizes = [2, 8], strides = [1, 1]} : vector<2x24xf32> to vector<2x8xf32>
    %217 = arith.addf %215, %216 : vector<2x8xf32>
    %218 = arith.negf %217 : vector<2x8xf32>
    %219 = math.exp %218 : vector<2x8xf32>
    %cst_54 = arith.constant 1.000000e+00 : f32
    %220 = vector.broadcast %cst_54 : f32 to vector<2x8xf32>
    %221 = arith.addf %220, %219 : vector<2x8xf32>
    %222 = arith.divf %220, %221 : vector<2x8xf32>
    %223 = vector.extract_strided_slice %213 {offsets = [0, 8], sizes = [2, 8], strides = [1, 1]} : vector<2x24xf32> to vector<2x8xf32>
    %224 = vector.extract_strided_slice %214 {offsets = [0, 8], sizes = [2, 8], strides = [1, 1]} : vector<2x24xf32> to vector<2x8xf32>
    %225 = arith.addf %223, %224 : vector<2x8xf32>
    %226 = arith.negf %225 : vector<2x8xf32>
    %227 = math.exp %226 : vector<2x8xf32>
    %cst_55 = arith.constant 1.000000e+00 : f32
    %228 = vector.broadcast %cst_55 : f32 to vector<2x8xf32>
    %229 = arith.addf %228, %227 : vector<2x8xf32>
    %230 = arith.divf %228, %229 : vector<2x8xf32>
    %231 = vector.extract_strided_slice %213 {offsets = [0, 16], sizes = [2, 8], strides = [1, 1]} : vector<2x24xf32> to vector<2x8xf32>
    %232 = vector.extract_strided_slice %214 {offsets = [0, 16], sizes = [2, 8], strides = [1, 1]} : vector<2x24xf32> to vector<2x8xf32>
    %233 = vector.broadcast %3 : vector<1x8xf32> to vector<2x8xf32>
    %234 = arith.addf %232, %233 : vector<2x8xf32>
    %235 = arith.mulf %222, %234 : vector<2x8xf32>
    %236 = arith.addf %231, %235 : vector<2x8xf32>
    %237 = math.tanh %236 : vector<2x8xf32>
    %cst_56 = arith.constant 1.000000e+00 : f32
    %238 = vector.broadcast %cst_56 : f32 to vector<2x8xf32>
    %239 = arith.subf %238, %230 : vector<2x8xf32>
    %240 = arith.mulf %239, %237 : vector<2x8xf32>
    %241 = arith.mulf %230, %208 : vector<2x8xf32>
    %242 = arith.addf %240, %241 : vector<2x8xf32>
    %c7 = arith.constant 7 : index
    %c0_57 = arith.constant 0 : index
    %c0_58 = arith.constant 0 : index
    %243 = vector.load %arg1[%c7, %c0_57, %c0_58] : memref<8x2x66xf32, #tpu.memory_space<vmem>>, vector<1x2x66xf32>
    %244 = vector.shape_cast %243 : vector<1x2x66xf32> to vector<2x66xf32>
    %cst_59 = arith.constant dense<0.000000e+00> : vector<2x24xf32>
    %245 = tpu.matmul %244, %0, %cst_59 {dimension_numbers = #tpu.dot_dimension_numbers<[1], [0], [0], [1], [0, 0, 1, 1], [], []>} : vector<2x66xf32>, vector<66x24xf32>, vector<2x24xf32> -> vector<2x24xf32>
    %246 = vector.broadcast %2 : vector<1x24xf32> to vector<2x24xf32>
    %247 = arith.addf %245, %246 : vector<2x24xf32>
    %cst_60 = arith.constant dense<0.000000e+00> : vector<2x24xf32>
    %248 = tpu.matmul %242, %1, %cst_60 {dimension_numbers = #tpu.dot_dimension_numbers<[1], [0], [0], [1], [0, 0, 1, 1], [], []>} : vector<2x8xf32>, vector<8x24xf32>, vector<2x24xf32> -> vector<2x24xf32>
    %249 = vector.extract_strided_slice %247 {offsets = [0, 0], sizes = [2, 8], strides = [1, 1]} : vector<2x24xf32> to vector<2x8xf32>
    %250 = vector.extract_strided_slice %248 {offsets = [0, 0], sizes = [2, 8], strides = [1, 1]} : vector<2x24xf32> to vector<2x8xf32>
    %251 = arith.addf %249, %250 : vector<2x8xf32>
    %252 = arith.negf %251 : vector<2x8xf32>
    %253 = math.exp %252 : vector<2x8xf32>
    %cst_61 = arith.constant 1.000000e+00 : f32
    %254 = vector.broadcast %cst_61 : f32 to vector<2x8xf32>
    %255 = arith.addf %254, %253 : vector<2x8xf32>
    %256 = arith.divf %254, %255 : vector<2x8xf32>
    %257 = vector.extract_strided_slice %247 {offsets = [0, 8], sizes = [2, 8], strides = [1, 1]} : vector<2x24xf32> to vector<2x8xf32>
    %258 = vector.extract_strided_slice %248 {offsets = [0, 8], sizes = [2, 8], strides = [1, 1]} : vector<2x24xf32> to vector<2x8xf32>
    %259 = arith.addf %257, %258 : vector<2x8xf32>
    %260 = arith.negf %259 : vector<2x8xf32>
    %261 = math.exp %260 : vector<2x8xf32>
    %cst_62 = arith.constant 1.000000e+00 : f32
    %262 = vector.broadcast %cst_62 : f32 to vector<2x8xf32>
    %263 = arith.addf %262, %261 : vector<2x8xf32>
    %264 = arith.divf %262, %263 : vector<2x8xf32>
    %265 = vector.extract_strided_slice %247 {offsets = [0, 16], sizes = [2, 8], strides = [1, 1]} : vector<2x24xf32> to vector<2x8xf32>
    %266 = vector.extract_strided_slice %248 {offsets = [0, 16], sizes = [2, 8], strides = [1, 1]} : vector<2x24xf32> to vector<2x8xf32>
    %267 = vector.broadcast %3 : vector<1x8xf32> to vector<2x8xf32>
    %268 = arith.addf %266, %267 : vector<2x8xf32>
    %269 = arith.mulf %256, %268 : vector<2x8xf32>
    %270 = arith.addf %265, %269 : vector<2x8xf32>
    %271 = math.tanh %270 : vector<2x8xf32>
    %cst_63 = arith.constant 1.000000e+00 : f32
    %272 = vector.broadcast %cst_63 : f32 to vector<2x8xf32>
    %273 = arith.subf %272, %264 : vector<2x8xf32>
    %274 = arith.mulf %273, %271 : vector<2x8xf32>
    %275 = arith.mulf %264, %242 : vector<2x8xf32>
    %276 = arith.addf %274, %275 : vector<2x8xf32>
    %c7_64 = arith.constant 7 : index
    %c0_65 = arith.constant 0 : index
    %c0_66 = arith.constant 0 : index
    %277 = vector.load %arg1[%c7_64, %c0_65, %c0_66] : memref<8x2x66xf32, #tpu.memory_space<vmem>>, vector<1x2x66xf32>
    %278 = vector.shape_cast %277 : vector<1x2x66xf32> to vector<2x66xf32>
    %c0_67 = arith.constant 0 : index
    %c0_68 = arith.constant 0 : index
    %279 = vector.load %arg6[%c0_67, %c0_68] : memref<66x24xf32, #tpu.memory_space<vmem>>, vector<66x24xf32>
    %cst_69 = arith.constant dense<0.000000e+00> : vector<2x24xf32>
    %280 = tpu.matmul %278, %279, %cst_69 {dimension_numbers = #tpu.dot_dimension_numbers<[1], [0], [0], [1], [0, 0, 1, 1], [], []>} : vector<2x66xf32>, vector<66x24xf32>, vector<2x24xf32> -> vector<2x24xf32>
    %c0_70 = arith.constant 0 : index
    %c0_71 = arith.constant 0 : index
    %281 = vector.load %arg7[%c0_70, %c0_71] : memref<1x24xf32, #tpu.memory_space<vmem>>, vector<1x24xf32>
    %282 = vector.broadcast %281 : vector<1x24xf32> to vector<2x24xf32>
    %283 = arith.addf %280, %282 : vector<2x24xf32>
    %284 = vector.extract_strided_slice %283 {offsets = [0, 0], sizes = [2, 8], strides = [1, 1]} : vector<2x24xf32> to vector<2x8xf32>
    %285 = arith.negf %284 : vector<2x8xf32>
    %286 = math.exp %285 : vector<2x8xf32>
    %cst_72 = arith.constant 1.000000e+00 : f32
    %287 = vector.broadcast %cst_72 : f32 to vector<2x8xf32>
    %288 = arith.addf %287, %286 : vector<2x8xf32>
    %289 = arith.divf %287, %288 : vector<2x8xf32>
    %290 = vector.extract_strided_slice %283 {offsets = [0, 8], sizes = [2, 8], strides = [1, 1]} : vector<2x24xf32> to vector<2x8xf32>
    %291 = arith.negf %290 : vector<2x8xf32>
    %292 = math.exp %291 : vector<2x8xf32>
    %cst_73 = arith.constant 1.000000e+00 : f32
    %293 = vector.broadcast %cst_73 : f32 to vector<2x8xf32>
    %294 = arith.addf %293, %292 : vector<2x8xf32>
    %295 = arith.divf %293, %294 : vector<2x8xf32>
    %296 = vector.extract_strided_slice %283 {offsets = [0, 16], sizes = [2, 8], strides = [1, 1]} : vector<2x24xf32> to vector<2x8xf32>
    %c0_74 = arith.constant 0 : index
    %c0_75 = arith.constant 0 : index
    %297 = vector.load %arg8[%c0_74, %c0_75] : memref<1x8xf32, #tpu.memory_space<vmem>>, vector<1x8xf32>
    %298 = vector.broadcast %297 : vector<1x8xf32> to vector<2x8xf32>
    %299 = arith.mulf %289, %298 : vector<2x8xf32>
    %300 = arith.addf %296, %299 : vector<2x8xf32>
    %301 = math.tanh %300 : vector<2x8xf32>
    %cst_76 = arith.constant 1.000000e+00 : f32
    %302 = vector.broadcast %cst_76 : f32 to vector<2x8xf32>
    %303 = arith.subf %302, %295 : vector<2x8xf32>
    %304 = arith.mulf %303, %301 : vector<2x8xf32>
    %c0_77 = arith.constant 0 : index
    %c0_78 = arith.constant 0 : index
    %305 = vector.load %arg9[%c0_77, %c0_78] : memref<8x64xf32, #tpu.memory_space<vmem>>, vector<8x64xf32>
    %cst_79 = arith.constant dense<0.000000e+00> : vector<2x64xf32>
    %306 = tpu.matmul %276, %305, %cst_79 {dimension_numbers = #tpu.dot_dimension_numbers<[1], [0], [0], [1], [0, 0, 1, 1], [], []>} : vector<2x8xf32>, vector<8x64xf32>, vector<2x64xf32> -> vector<2x64xf32>
    %c0_80 = arith.constant 0 : index
    %c0_81 = arith.constant 0 : index
    %307 = vector.load %arg10[%c0_80, %c0_81] : memref<8x64xf32, #tpu.memory_space<vmem>>, vector<8x64xf32>
    %cst_82 = arith.constant dense<0.000000e+00> : vector<2x64xf32>
    %308 = tpu.matmul %304, %307, %cst_82 {dimension_numbers = #tpu.dot_dimension_numbers<[1], [0], [0], [1], [0, 0, 1, 1], [], []>} : vector<2x8xf32>, vector<8x64xf32>, vector<2x64xf32> -> vector<2x64xf32>
    %309 = arith.addf %306, %308 : vector<2x64xf32>
    %c0_83 = arith.constant 0 : index
    %c0_84 = arith.constant 0 : index
    %310 = vector.load %arg11[%c0_83, %c0_84] : memref<1x64xf32, #tpu.memory_space<vmem>>, vector<1x64xf32>
    %311 = vector.broadcast %310 : vector<1x64xf32> to vector<2x64xf32>
    %312 = arith.addf %309, %311 : vector<2x64xf32>
    %cst_85 = arith.constant 0.000000e+00 : f32
    %313 = vector.broadcast %cst_85 : f32 to vector<2x64xf32>
    %314 = arith.maximumf %312, %313 : vector<2x64xf32>
    %c0_86 = arith.constant 0 : index
    %c0_87 = arith.constant 0 : index
    %315 = vector.load %arg12[%c0_86, %c0_87] : memref<64x64xf32, #tpu.memory_space<vmem>>, vector<64x64xf32>
    %cst_88 = arith.constant dense<0.000000e+00> : vector<2x64xf32>
    %316 = tpu.matmul %314, %315, %cst_88 {dimension_numbers = #tpu.dot_dimension_numbers<[1], [0], [0], [1], [0, 0, 1, 1], [], []>} : vector<2x64xf32>, vector<64x64xf32>, vector<2x64xf32> -> vector<2x64xf32>
    %c0_89 = arith.constant 0 : index
    %c0_90 = arith.constant 0 : index
    %317 = vector.load %arg13[%c0_89, %c0_90] : memref<1x64xf32, #tpu.memory_space<vmem>>, vector<1x64xf32>
    %318 = vector.broadcast %317 : vector<1x64xf32> to vector<2x64xf32>
    %319 = arith.addf %316, %318 : vector<2x64xf32>
    %cst_91 = arith.constant 0.000000e+00 : f32
    %320 = vector.broadcast %cst_91 : f32 to vector<2x64xf32>
    %321 = arith.maximumf %319, %320 : vector<2x64xf32>
    %c0_92 = arith.constant 0 : index
    %c0_93 = arith.constant 0 : index
    %322 = vector.load %arg14[%c0_92, %c0_93] : memref<64x128xf32, #tpu.memory_space<vmem>>, vector<64x128xf32>
    %cst_94 = arith.constant dense<0.000000e+00> : vector<2x128xf32>
    %323 = tpu.matmul %321, %322, %cst_94 {dimension_numbers = #tpu.dot_dimension_numbers<[1], [0], [0], [1], [0, 0, 1, 1], [], []>} : vector<2x64xf32>, vector<64x128xf32>, vector<2x128xf32> -> vector<2x128xf32>
    %c0_95 = arith.constant 0 : index
    %c0_96 = arith.constant 0 : index
    %324 = vector.load %arg15[%c0_95, %c0_96] : memref<1x128xf32, #tpu.memory_space<vmem>>, vector<1x128xf32>
    %325 = vector.broadcast %324 : vector<1x128xf32> to vector<2x128xf32>
    %326 = arith.addf %323, %325 : vector<2x128xf32>
    %c0_97 = arith.constant 0 : index
    %c0_98 = arith.constant 0 : index
    %327 = vector.load %arg16[%c0_97, %c0_98] : memref<2x128xf32, #tpu.memory_space<vmem>>, vector<2x128xf32>
    tpu.vector_store %arg16[%c0_97, %c0_98], %326 {strides = array<i32>} : memref<2x128xf32, #tpu.memory_space<vmem>>, vector<2x128xf32>,
    return
  }
  func.func @transform_0(%arg0: i32) -> (i32, i32, i32) {
    %c0_i32 = arith.constant 0 : i32
    %c0_i32_0 = arith.constant 0 : i32
    %c0_i32_1 = arith.constant 0 : i32
    return %c0_i32, %arg0, %c0_i32_0 : i32, i32, i32
  }
  func.func @transform_1(%arg0: i32) -> (i32, i32) {
    %c0_i32 = arith.constant 0 : i32
    %c0_i32_0 = arith.constant 0 : i32
    %c0_i32_1 = arith.constant 0 : i32
    return %c0_i32, %c0_i32_0 : i32, i32
  }
  func.func @transform_2(%arg0: i32) -> (i32, i32) {
    %c0_i32 = arith.constant 0 : i32
    %c0_i32_0 = arith.constant 0 : i32
    %c0_i32_1 = arith.constant 0 : i32
    return %c0_i32, %c0_i32_0 : i32, i32
  }
  func.func @transform_3(%arg0: i32) -> (i32, i32) {
    %c0_i32 = arith.constant 0 : i32
    %c0_i32_0 = arith.constant 0 : i32
    %c0_i32_1 = arith.constant 0 : i32
    return %c0_i32, %c0_i32_0 : i32, i32
  }
  func.func @transform_4(%arg0: i32) -> (i32, i32) {
    %c0_i32 = arith.constant 0 : i32
    %c0_i32_0 = arith.constant 0 : i32
    %c0_i32_1 = arith.constant 0 : i32
    return %c0_i32, %c0_i32_0 : i32, i32
  }
  func.func @transform_5(%arg0: i32) -> (i32, i32) {
    %c0_i32 = arith.constant 0 : i32
    %c0_i32_0 = arith.constant 0 : i32
    %c0_i32_1 = arith.constant 0 : i32
    return %c0_i32, %c0_i32_0 : i32, i32
  }
  func.func @transform_6(%arg0: i32) -> (i32, i32) {
    %c0_i32 = arith.constant 0 : i32
    %c0_i32_0 = arith.constant 0 : i32
    %c0_i32_1 = arith.constant 0 : i32
    return %c0_i32, %c0_i32_0 : i32, i32
  }
  func.func @transform_7(%arg0: i32) -> (i32, i32) {
    %c0_i32 = arith.constant 0 : i32
    %c0_i32_0 = arith.constant 0 : i32
    %c0_i32_1 = arith.constant 0 : i32
    return %c0_i32, %c0_i32_0 : i32, i32
  }
  func.func @transform_8(%arg0: i32) -> (i32, i32) {
    %c0_i32 = arith.constant 0 : i32
    %c0_i32_0 = arith.constant 0 : i32
    %c0_i32_1 = arith.constant 0 : i32
    return %c0_i32, %c0_i32_0 : i32, i32
  }
  func.func @transform_9(%arg0: i32) -> (i32, i32) {
    %c0_i32 = arith.constant 0 : i32
    %c0_i32_0 = arith.constant 0 : i32
    %c0_i32_1 = arith.constant 0 : i32
    return %c0_i32, %c0_i32_0 : i32, i32
  }
  func.func @transform_10(%arg0: i32) -> (i32, i32) {
    %c0_i32 = arith.constant 0 : i32
    %c0_i32_0 = arith.constant 0 : i32
    %c0_i32_1 = arith.constant 0 : i32
    return %c0_i32, %c0_i32_0 : i32, i32
  }
  func.func @transform_11(%arg0: i32) -> (i32, i32) {
    %c0_i32 = arith.constant 0 : i32
    %c0_i32_0 = arith.constant 0 : i32
    %c0_i32_1 = arith.constant 0 : i32
    return %c0_i32, %c0_i32_0 : i32, i32
  }
  func.func @transform_12(%arg0: i32) -> (i32, i32) {
    %c0_i32 = arith.constant 0 : i32
    %c0_i32_0 = arith.constant 0 : i32
    %c0_i32_1 = arith.constant 0 : i32
    return %c0_i32, %c0_i32_0 : i32, i32
  }
  func.func @transform_13(%arg0: i32) -> (i32, i32) {
    %c0_i32 = arith.constant 0 : i32
    %c0_i32_0 = arith.constant 0 : i32
    %c0_i32_1 = arith.constant 0 : i32
    return %c0_i32, %c0_i32_0 : i32, i32
  }
  func.func @transform_14(%arg0: i32) -> (i32, i32) {
    %c0_i32 = arith.constant 0 : i32
    %c0_i32_0 = arith.constant 0 : i32
    %c0_i32_1 = arith.constant 0 : i32
    return %c0_i32, %c0_i32_0 : i32, i32
  }
  func.func @transform_15(%arg0: i32) -> (i32, i32) {
    %c0_i32 = arith.constant 0 : i32
    %c0_i32_0 = arith.constant 0 : i32
    return %arg0, %c0_i32 : i32, i32
  }
}

</mosaic_0001>

<llo_original>
// kernel: tpu_custom_call.1
$region0: #{tpu_custom_call.1}
  #allocation0 [shape = 'u32[]', space=smem, size = 0x4, offset = 0x4, fixed_abs, tag = 'smem constant byte address 0x4 - core index']
  #allocation1 [shape = 'u32[144,128]{1,0:T(1,128)}', space=vmem, size = 0x12000, scoped, tag = 'internal scratch']
  %s0 = inlined_call_operand.vmem [shape: f32[8,2,66], index: 0, kind: input, shape index: {}]
  %s1 = inlined_call_operand.vmem [shape: f32[66,24], index: 1, kind: input, shape index: {}]
  %s2 = inlined_call_operand.vmem [shape: f32[8,24], index: 2, kind: input, shape index: {}]
  %s3 = inlined_call_operand.vmem [shape: f32[1,24], index: 3, kind: input, shape index: {}]
  %s4 = inlined_call_operand.vmem [shape: f32[1,8], index: 4, kind: input, shape index: {}]
  %s5 = inlined_call_operand.vmem [shape: f32[66,24], index: 5, kind: input, shape index: {}]
  %s6 = inlined_call_operand.vmem [shape: f32[1,24], index: 6, kind: input, shape index: {}]
  %s7 = inlined_call_operand.vmem [shape: f32[1,8], index: 7, kind: input, shape index: {}]
  %s8 = inlined_call_operand.vmem [shape: f32[8,64], index: 8, kind: input, shape index: {}]
  %s9 = inlined_call_operand.vmem [shape: f32[8,64], index: 9, kind: input, shape index: {}]
  %s10 = inlined_call_operand.vmem [shape: f32[1,64], index: 10, kind: input, shape index: {}]
  %s11 = inlined_call_operand.vmem [shape: f32[64,64], index: 11, kind: input, shape index: {}]
  %s12 = inlined_call_operand.vmem [shape: f32[1,64], index: 12, kind: input, shape index: {}]
  %s13 = inlined_call_operand.vmem [shape: f32[64,128], index: 13, kind: input, shape index: {}]
  %s14 = inlined_call_operand.vmem [shape: f32[1,128], index: 14, kind: input, shape index: {}]
  %s15 = inlined_call_operand.hbm [shape: f32[2,128], index: 15, kind: output, shape index: {}]
  %s16 = sld [smem:[#allocation0]]
  $region70: #{tpu_custom_call.1} parent=0
    _
  %s18 = ssub.s32 1, %s16
  %s19 = scalar_select 0, %s18, %s16
  $region1: #{tpu_custom_call.1} parent=0
    #allocation2 [shape = 'u8[1024]{0}', space=vmem, size = 0x400, scoped, tag = 'output window, operand 0, single buffered']
    #allocation3 [shape = 's32[1]{0}', space=sflag, size = 0x4, scoped, tag = 'scoped memory for tpu_custom_call.1']
    %20 = vsyncpa [#allocation3], 0
    // Predicated region
    $region2: #{tpu_custom_call.1} parent=1 // pred_check
      _
    $region3: #{tpu_custom_call.1} parent=1 // pred_check_branch
      %22 = sbr.rel (0) target = $region5
    $region4: #{tpu_custom_call.1} parent=1 // pred_region
      _
    $region5: #{tpu_custom_call.1} parent=1 // pred_fallthru
      _
    // Predicated region
    $region6: #{tpu_custom_call.1} parent=1 // pred_check
      _
    $region7: #{tpu_custom_call.1} parent=1 // pred_check_branch
      %24 = sbr.rel (0) target = $region9
    $region8: #{tpu_custom_call.1} parent=1 // pred_region
      _
    $region9: #{tpu_custom_call.1} parent=1 // pred_fallthru
      _
    // Predicated region
    $region10: #{tpu_custom_call.1} parent=1 // pred_check
      _
    $region11: #{tpu_custom_call.1} parent=1 // pred_check_branch
      %26 = sbr.rel (0) target = $region13
    $region12: #{tpu_custom_call.1} parent=1 // pred_region
      _
    $region13: #{tpu_custom_call.1} parent=1 // pred_fallthru
      _
    // Predicated region
    $region14: #{tpu_custom_call.1} parent=1 // pred_check
      _
    $region15: #{tpu_custom_call.1} parent=1 // pred_check_branch
      %28 = sbr.rel (0) target = $region17
    $region16: #{tpu_custom_call.1} parent=1 // pred_region
      _
    $region17: #{tpu_custom_call.1} parent=1 // pred_fallthru
      _
    // Predicated region
    $region18: #{tpu_custom_call.1} parent=1 // pred_check
      _
    $region19: #{tpu_custom_call.1} parent=1 // pred_check_branch
      %30 = sbr.rel (0) target = $region21
    $region20: #{tpu_custom_call.1} parent=1 // pred_region
      _
    $region21: #{tpu_custom_call.1} parent=1 // pred_fallthru
      _
    // Predicated region
    $region22: #{tpu_custom_call.1} parent=1 // pred_check
      _
    $region23: #{tpu_custom_call.1} parent=1 // pred_check_branch
      %32 = sbr.rel (0) target = $region25
    $region24: #{tpu_custom_call.1} parent=1 // pred_region
      _
    $region25: #{tpu_custom_call.1} parent=1 // pred_fallthru
      _
    // Predicated region
    $region26: #{tpu_custom_call.1} parent=1 // pred_check
      _
    $region27: #{tpu_custom_call.1} parent=1 // pred_check_branch
      %34 = sbr.rel (0) target = $region29
    $region28: #{tpu_custom_call.1} parent=1 // pred_region
      _
    $region29: #{tpu_custom_call.1} parent=1 // pred_fallthru
      _
    // Predicated region
    $region30: #{tpu_custom_call.1} parent=1 // pred_check
      _
    $region31: #{tpu_custom_call.1} parent=1 // pred_check_branch
      %36 = sbr.rel (0) target = $region33
    $region32: #{tpu_custom_call.1} parent=1 // pred_region
      _
    $region33: #{tpu_custom_call.1} parent=1 // pred_fallthru
      _
    // Predicated region
    $region34: #{tpu_custom_call.1} parent=1 // pred_check
      _
    $region35: #{tpu_custom_call.1} parent=1 // pred_check_branch
      %38 = sbr.rel (0) target = $region37
    $region36: #{tpu_custom_call.1} parent=1 // pred_region
      _
    $region37: #{tpu_custom_call.1} parent=1 // pred_fallthru
      _
    // Predicated region
    $region38: #{tpu_custom_call.1} parent=1 // pred_check
      _
    $region39: #{tpu_custom_call.1} parent=1 // pred_check_branch
      %40 = sbr.rel (0) target = $region41
    $region40: #{tpu_custom_call.1} parent=1 // pred_region
      _
    $region41: #{tpu_custom_call.1} parent=1 // pred_fallthru
      _
    // Predicated region
    $region42: #{tpu_custom_call.1} parent=1 // pred_check
      _
    $region43: #{tpu_custom_call.1} parent=1 // pred_check_branch
      %42 = sbr.rel (0) target = $region45
    $region44: #{tpu_custom_call.1} parent=1 // pred_region
      _
    $region45: #{tpu_custom_call.1} parent=1 // pred_fallthru
      _
    // Predicated region
    $region46: #{tpu_custom_call.1} parent=1 // pred_check
      _
    $region47: #{tpu_custom_call.1} parent=1 // pred_check_branch
      %44 = sbr.rel (0) target = $region49
    $region48: #{tpu_custom_call.1} parent=1 // pred_region
      _
    $region49: #{tpu_custom_call.1} parent=1 // pred_fallthru
      _
    // Predicated region
    $region50: #{tpu_custom_call.1} parent=1 // pred_check
      _
    $region51: #{tpu_custom_call.1} parent=1 // pred_check_branch
      %46 = sbr.rel (0) target = $region53
    $region52: #{tpu_custom_call.1} parent=1 // pred_region
      _
    $region53: #{tpu_custom_call.1} parent=1 // pred_fallthru
      _
    // Predicated region
    $region54: #{tpu_custom_call.1} parent=1 // pred_check
      _
    $region55: #{tpu_custom_call.1} parent=1 // pred_check_branch
      %48 = sbr.rel (0) target = $region57
    $region56: #{tpu_custom_call.1} parent=1 // pred_region
      _
    $region57: #{tpu_custom_call.1} parent=1 // pred_fallthru
      _
    // Predicated region
    $region58: #{tpu_custom_call.1} parent=1 // pred_check
      _
    $region59: #{tpu_custom_call.1} parent=1 // pred_check_branch
      %50 = sbr.rel (0) target = $region61
    $region60: #{tpu_custom_call.1} parent=1 // pred_region
      _
    $region61: #{tpu_custom_call.1} parent=1 // pred_fallthru
      _
    %v51 = vld [vmem:[%s1] sm:$0xff]
    %v52 = vld [vmem:[%s1 + $0x8] sm:$0xff]
    %v53 = vld [vmem:[%s1 + $0x10] sm:$0xff]
    %v54 = vld [vmem:[%s1 + $0x18] sm:$0xff]
    %v55 = vld [vmem:[%s1 + $0x20] sm:$0xff]
    %v56 = vld [vmem:[%s1 + $0x28] sm:$0xff]
    %v57 = vld [vmem:[%s1 + $0x30] sm:$0xff]
    %v58 = vld [vmem:[%s1 + $0x38] sm:$0xff]
    %v59 = vld [vmem:[%s1 + $0x40] sm:$0x3]
    %v60 = vld [vmem:[%s2] sm:$0xff]
    %v61 = vld [vmem:[%s3] sm:$0x1]
    %v62 = vld [vmem:[%s4] sm:$0x1]
    %v63 = vld [vmem:[%s0] sm:$0x3]
    %v65 = vlaneseq
    %v66 = vshrl.u32 %v65, 7
    %v67 = vsub.s32 0, %v66
    %v68 = vrot.slane %v61, %v67
    %vm70 = vcmask 539648
    %v72 = vsel %vm70, %v63, 0
    %vm74 = vcmask 1041408
    %v76 = vsel %vm74, %v59, 0
    %78 = vmatprep.subr.mxu0 0.0
    %79 = vmatpush1.msra.mxu0 %v51
    %80 = vmatprep.subr.mxu0 0.0
    %81 = vmatpush1.msra.mxu0 %v52
    %82 = vmatprep.subr.mxu0 0.0
    %83 = vmatpush1.msra.mxu0 %v53
    %84 = vmatprep.subr.mxu0 0.0
    %85 = vmatpush1.msra.mxu0 %v54
    %86 = vmatprep.subr.mxu0 0.0
    %87 = vmatpush1.msra.mxu0 %v55
    %88 = vmatprep.subr.mxu0 0.0
    %89 = vmatpush1.msra.mxu0 %v56
    %90 = vmatprep.subr.mxu0 0.0
    %91 = vmatpush1.msra.mxu0 %v57
    %92 = vmatprep.subr.mxu0 0.0
    %93 = vmatpush1.msra.mxu0 %v58
    %94 = vmatprep.subr.mxu0 0.0
    %95 = vmatpush1.msra.mxu0 %v76
    %96 = vmatprep.subr.mxu0 0.0
    %97 = vmatpush1.msra.mxu0 0.0
    %98 = vmatprep.subr.mxu0 0.0
    %99 = vmatpush1.msra.mxu0 0.0
    %100 = vmatprep.subr.mxu0 0.0
    %101 = vmatpush1.msra.mxu0 0.0
    %102 = vmatprep.subr.mxu0 0.0
    %103 = vmatpush1.msra.mxu0 0.0
    %104 = vmatprep.subr.mxu0 0.0
    %105 = vmatpush1.msra.mxu0 0.0
    %106 = vmatprep.subr.mxu0 0.0
    %107 = vmatpush1.msra.mxu0 0.0
    %108 = vmatprep.subr.mxu0 0.0
    %109 = vmatpush1.msra.mxu0 0.0
    %110 = vmatprep.subr.mxu0 0.0
    %111 = vmatpush1.msra.mxu0 0.0
    %112 = vmatprep.subr.mxu0 0.0
    %113 = vmatpush1.msra.mxu0 0.0
    %114 = vmatprep.subr.mxu0 0.0
    %115 = vmatpush1.msra.mxu0 0.0
    %116 = vmatprep.subr.mxu0 0.0
    %117 = vmatpush1.msra.mxu0 0.0
    %118 = vmatprep.subr.mxu0 0.0
    %119 = vmatpush1.msra.mxu0 0.0
    %120 = vmatprep.subr.mxu0 0.0
    %121 = vmatpush1.msra.mxu0 0.0
    %122 = vmatprep.subr.mxu0 0.0
    %123 = vmatpush1.msra.mxu0 0.0
    %124 = vmatprep.subr.mxu0 0.0
    %125 = vmatpush1.msra.mxu0 0.0
    %126 = vmatprep.subr.mxu0 0.0
    %127 = vmatpush1.msra.mxu0 0.0
    %128 = vmatprep.subr.mxu0 0.0
    %129 = vmatpush1.msra.mxu0 0.0
    %130 = vmatprep.subr.mxu0 0.0
    %131 = vmatpush1.msra.mxu0 0.0
    %132 = vmatprep.subr.mxu0 0.0
    %133 = vmatpush1.msra.mxu0 0.0
    %134 = vmatprep.subr.mxu0 0.0
    %135 = vmatpush1.msra.mxu0 0.0
    %136 = vmatprep.subr.mxu0 0.0
    %137 = vmatpush1.msra.mxu0 0.0
    %138 = vmatprep.subr.mxu0 0.0
    %139 = vmatpush1.msra.mxu0 0.0
    %140 = vmatprep.subr.mxu0 0.0
    %141 = vmatpush1.msra.mxu0 0.0
    %142 = vmatprep.mubr.f32.mxu0 0.0
    %143 = vmatmul.mubr.f32.gmra.mrb[0].mxu0 %v72
    %v144 = vpop.f32.mrb[0].mxu0
    %v145 = vadd.f32 %v68, %v144
    %v146 = vpop.f32.mrb[0].mxu0
    %147 = vdwg.mxu0
    %vm148 = vcmask 64512
    %v150 = vsel %vm148, 0.0, 0
    %152 = vmatprep.subr.mxu0 0.0
    %153 = vmatpush1.msra.mxu0 %v60
    %154 = vmatprep.subr.mxu0 0.0
    %155 = vmatpush1.msra.mxu0 0.0
    %156 = vmatprep.subr.mxu0 0.0
    %157 = vmatpush1.msra.mxu0 0.0
    %158 = vmatprep.subr.mxu0 0.0
    %159 = vmatpush1.msra.mxu0 0.0
    %160 = vmatprep.subr.mxu0 0.0
    %161 = vmatpush1.msra.mxu0 0.0
    %162 = vmatprep.subr.mxu0 0.0
    %163 = vmatpush1.msra.mxu0 0.0
    %164 = vmatprep.subr.mxu0 0.0
    %165 = vmatpush1.msra.mxu0 0.0
    %166 = vmatprep.subr.mxu0 0.0
    %167 = vmatpush1.msra.mxu0 0.0
    %168 = vmatprep.subr.mxu0 0.0
    %169 = vmatpush1.msra.mxu0 0.0
    %170 = vmatprep.subr.mxu0 0.0
    %171 = vmatpush1.msra.mxu0 0.0
    %172 = vmatprep.subr.mxu0 0.0
    %173 = vmatpush1.msra.mxu0 0.0
    %174 = vmatprep.subr.mxu0 0.0
    %175 = vmatpush1.msra.mxu0 0.0
    %176 = vmatprep.subr.mxu0 0.0
    %177 = vmatpush1.msra.mxu0 0.0
    %178 = vmatprep.subr.mxu0 0.0
    %179 = vmatpush1.msra.mxu0 0.0
    %180 = vmatprep.subr.mxu0 0.0
    %181 = vmatpush1.msra.mxu0 0.0
    %182 = vmatprep.subr.mxu0 0.0
    %183 = vmatpush1.msra.mxu0 0.0
    %184 = vmatprep.subr.mxu0 0.0
    %185 = vmatpush1.msra.mxu0 0.0
    %186 = vmatprep.subr.mxu0 0.0
    %187 = vmatpush1.msra.mxu0 0.0
    %188 = vmatprep.subr.mxu0 0.0
    %189 = vmatpush1.msra.mxu0 0.0
    %190 = vmatprep.subr.mxu0 0.0
    %191 = vmatpush1.msra.mxu0 0.0
    %192 = vmatprep.subr.mxu0 0.0
    %193 = vmatpush1.msra.mxu0 0.0
    %194 = vmatprep.subr.mxu0 0.0
    %195 = vmatpush1.msra.mxu0 0.0
    %196 = vmatprep.subr.mxu0 0.0
    %197 = vmatpush1.msra.mxu0 0.0
    %198 = vmatprep.subr.mxu0 0.0
    %199 = vmatpush1.msra.mxu0 0.0
    %200 = vmatprep.subr.mxu0 0.0
    %201 = vmatpush1.msra.mxu0 0.0
    %202 = vmatprep.subr.mxu0 0.0
    %203 = vmatpush1.msra.mxu0 0.0
    %204 = vmatprep.subr.mxu0 0.0
    %205 = vmatpush1.msra.mxu0 0.0
    %206 = vmatprep.subr.mxu0 0.0
    %207 = vmatpush1.msra.mxu0 0.0
    %208 = vmatprep.subr.mxu0 0.0
    %209 = vmatpush1.msra.mxu0 0.0
    %210 = vmatprep.subr.mxu0 0.0
    %211 = vmatpush1.msra.mxu0 0.0
    %212 = vmatprep.subr.mxu0 0.0
    %213 = vmatpush1.msra.mxu0 0.0
    %214 = vmatprep.subr.mxu0 0.0
    %215 = vmatpush1.msra.mxu0 0.0
    %216 = vmatprep.mubr.f32.mxu0 0.0
    %217 = vmatmul.mubr.f32.gmra.mrb[0].mxu0 %v150
    %v218 = vpop.f32.mrb[0].mxu0
    %v219 = vadd.f32 0.0, %v218
    %v220 = vpop.f32.mrb[0].mxu0
    %221 = vdwg.mxu0
    %v222 = vadd.f32 %v145, %v219
    %v223 = vxor.u32 %v222, 2147483648
    %v224 = vmul.f32 %v223, 1.442695
    %v225 = vpow.pop %v224
    %v226 = vadd.f32 %v225, 1.0
    %v227 = vrcp.pop %v226
    %v228 = vmul.f32 1.0, %v227
    %v230 = vlaneseq
    %v231 = vshrl.u32 %v230, 7
    %v232 = vsub.s32 0, %v231
    %v233 = vrot.slane %v62, %v232
    %234 = vrot.lane.b32.xlu0 %v233, 16
    %v235 = vpop.permute.xlu0 %234
    %v237 = vadd.f32 %v219, %v235
    %239 = vrot.lane.b32.xlu0 %v237, 112
    %v240 = vpop.permute.xlu0 %239
    %v242 = vmul.f32 %v228, %v240
    %244 = vrot.lane.b32.xlu0 %v242, 16
    %v245 = vpop.permute.xlu0 %244
    %v247 = vadd.f32 %v145, %v245
    %v248 = vtanh.pop %v247
    %v249 = vsub.f32 1.0, %v228
    %251 = vrot.lane.b32.xlu0 %v248, 120
    %v252 = vpop.permute.xlu0 %251
    %v254 = vmul.f32 %v249, %v252
    %v255 = vmul.f32 %v228, 0.0
    %v256 = vadd.f32 %v254, %v255
    %s257 = scalar_lea.vmem %s0, 2
    %v258 = vld [vmem:[%s257] sm:$0x3]
    %v260 = vsel %vm70, %v258, 0
    %262 = vmatprep.subr.mxu0 0.0
    %263 = vmatpush1.msra.mxu0 %v51
    %264 = vmatprep.subr.mxu0 0.0
    %265 = vmatpush1.msra.mxu0 %v52
    %266 = vmatprep.subr.mxu0 0.0
    %267 = vmatpush1.msra.mxu0 %v53
    %268 = vmatprep.subr.mxu0 0.0
    %269 = vmatpush1.msra.mxu0 %v54
    %270 = vmatprep.subr.mxu0 0.0
    %271 = vmatpush1.msra.mxu0 %v55
    %272 = vmatprep.subr.mxu0 0.0
    %273 = vmatpush1.msra.mxu0 %v56
    %274 = vmatprep.subr.mxu0 0.0
    %275 = vmatpush1.msra.mxu0 %v57
    %276 = vmatprep.subr.mxu0 0.0
    %277 = vmatpush1.msra.mxu0 %v58
    %278 = vmatprep.subr.mxu0 0.0
    %279 = vmatpush1.msra.mxu0 %v76
    %280 = vmatprep.subr.mxu0 0.0
    %281 = vmatpush1.msra.mxu0 0.0
    %282 = vmatprep.subr.mxu0 0.0
    %283 = vmatpush1.msra.mxu0 0.0
    %284 = vmatprep.subr.mxu0 0.0
    %285 = vmatpush1.msra.mxu0 0.0
    %286 = vmatprep.subr.mxu0 0.0
    %287 = vmatpush1.msra.mxu0 0.0
    %288 = vmatprep.subr.mxu0 0.0
    %289 = vmatpush1.msra.mxu0 0.0
    %290 = vmatprep.subr.mxu0 0.0
    %291 = vmatpush1.msra.mxu0 0.0
    %292 = vmatprep.subr.mxu0 0.0
    %293 = vmatpush1.msra.mxu0 0.0
    %294 = vmatprep.subr.mxu0 0.0
    %295 = vmatpush1.msra.mxu0 0.0
    %296 = vmatprep.subr.mxu0 0.0
    %297 = vmatpush1.msra.mxu0 0.0
    %298 = vmatprep.subr.mxu0 0.0
    %299 = vmatpush1.msra.mxu0 0.0
    %300 = vmatprep.subr.mxu0 0.0
    %301 = vmatpush1.msra.mxu0 0.0
    %302 = vmatprep.subr.mxu0 0.0
    %303 = vmatpush1.msra.mxu0 0.0
    %304 = vmatprep.subr.mxu0 0.0
    %305 = vmatpush1.msra.mxu0 0.0
    %306 = vmatprep.subr.mxu0 0.0
    %307 = vmatpush1.msra.mxu0 0.0
    %308 = vmatprep.subr.mxu0 0.0
    %309 = vmatpush1.msra.mxu0 0.0
    %310 = vmatprep.subr.mxu0 0.0
    %311 = vmatpush1.msra.mxu0 0.0
    %312 = vmatprep.subr.mxu0 0.0
    %313 = vmatpush1.msra.mxu0 0.0
    %314 = vmatprep.subr.mxu0 0.0
    %315 = vmatpush1.msra.mxu0 0.0
    %316 = vmatprep.subr.mxu0 0.0
    %317 = vmatpush1.msra.mxu0 0.0
    %318 = vmatprep.subr.mxu0 0.0
    %319 = vmatpush1.msra.mxu0 0.0
    %320 = vmatprep.subr.mxu0 0.0
    %321 = vmatpush1.msra.mxu0 0.0
    %322 = vmatprep.subr.mxu0 0.0
    %323 = vmatpush1.msra.mxu0 0.0
    %324 = vmatprep.subr.mxu0 0.0
    %325 = vmatpush1.msra.mxu0 0.0
    %326 = vmatprep.mubr.f32.mxu0 0.0
    %327 = vmatmul.mubr.f32.gmra.mrb[0].mxu0 %v260
    %v328 = vpop.f32.mrb[0].mxu0
    %v329 = vadd.f32 %v68, %v328
    %v330 = vpop.f32.mrb[0].mxu0
    %331 = vdwg.mxu0
    %333 = vrot.lane.b32.xlu0 %v256, 120
    %v334 = vpop.permute.xlu0 %333
    %v335 = vsel %vm148, %v334, 0
    %337 = vmatprep.subr.mxu0 0.0
    %338 = vmatpush1.msra.mxu0 %v60
    %339 = vmatprep.subr.mxu0 0.0
    %340 = vmatpush1.msra.mxu0 0.0
    %341 = vmatprep.subr.mxu0 0.0
    %342 = vmatpush1.msra.mxu0 0.0
    %343 = vmatprep.subr.mxu0 0.0
    %344 = vmatpush1.msra.mxu0 0.0
    %345 = vmatprep.subr.mxu0 0.0
    %346 = vmatpush1.msra.mxu0 0.0
    %347 = vmatprep.subr.mxu0 0.0
    %348 = vmatpush1.msra.mxu0 0.0
    %349 = vmatprep.subr.mxu0 0.0
    %350 = vmatpush1.msra.mxu0 0.0
    %351 = vmatprep.subr.mxu0 0.0
    %352 = vmatpush1.msra.mxu0 0.0
    %353 = vmatprep.subr.mxu0 0.0
    %354 = vmatpush1.msra.mxu0 0.0
    %355 = vmatprep.subr.mxu0 0.0
    %356 = vmatpush1.msra.mxu0 0.0
    %357 = vmatprep.subr.mxu0 0.0
    %358 = vmatpush1.msra.mxu0 0.0
    %359 = vmatprep.subr.mxu0 0.0
    %360 = vmatpush1.msra.mxu0 0.0
    %361 = vmatprep.subr.mxu0 0.0
    %362 = vmatpush1.msra.mxu0 0.0
    %363 = vmatprep.subr.mxu0 0.0
    %364 = vmatpush1.msra.mxu0 0.0
    %365 = vmatprep.subr.mxu0 0.0
    %366 = vmatpush1.msra.mxu0 0.0
    %367 = vmatprep.subr.mxu0 0.0
    %368 = vmatpush1.msra.mxu0 0.0
    %369 = vmatprep.subr.mxu0 0.0
    %370 = vmatpush1.msra.mxu0 0.0
    %371 = vmatprep.subr.mxu0 0.0
    %372 = vmatpush1.msra.mxu0 0.0
    %373 = vmatprep.subr.mxu0 0.0
    %374 = vmatpush1.msra.mxu0 0.0
    %375 = vmatprep.subr.mxu0 0.0
    %376 = vmatpush1.msra.mxu0 0.0
    %377 = vmatprep.subr.mxu0 0.0
    %378 = vmatpush1.msra.mxu0 0.0
    %379 = vmatprep.subr.mxu0 0.0
    %380 = vmatpush1.msra.mxu0 0.0
    %381 = vmatprep.subr.mxu0 0.0
    %382 = vmatpush1.msra.mxu0 0.0
    %383 = vmatprep.subr.mxu0 0.0
    %384 = vmatpush1.msra.mxu0 0.0
    %385 = vmatprep.subr.mxu0 0.0
    %386 = vmatpush1.msra.mxu0 0.0
    %387 = vmatprep.subr.mxu0 0.0
    %388 = vmatpush1.msra.mxu0 0.0
    %389 = vmatprep.subr.mxu0 0.0
    %390 = vmatpush1.msra.mxu0 0.0
    %391 = vmatprep.subr.mxu0 0.0
    %392 = vmatpush1.msra.mxu0 0.0
    %393 = vmatprep.subr.mxu0 0.0
    %394 = vmatpush1.msra.mxu0 0.0
    %395 = vmatprep.subr.mxu0 0.0
    %396 = vmatpush1.msra.mxu0 0.0
    %397 = vmatprep.subr.mxu0 0.0
    %398 = vmatpush1.msra.mxu0 0.0
    %399 = vmatprep.subr.mxu0 0.0
    %400 = vmatpush1.msra.mxu0 0.0
    %401 = vmatprep.mubr.f32.mxu0 0.0
    %402 = vmatmul.mubr.f32.gmra.mrb[0].mxu0 %v335
    %v403 = vpop.f32.mrb[0].mxu0
    %v404 = vadd.f32 0.0, %v403
    %v405 = vpop.f32.mrb[0].mxu0
    %406 = vdwg.mxu0
    %v407 = vadd.f32 %v329, %v404
    %v408 = vxor.u32 %v407, 2147483648
    %v409 = vmul.f32 %v408, 1.442695
    %v410 = vpow.pop %v409
    %v411 = vadd.f32 %v410, 1.0
    %v412 = vrcp.pop %v411
    %v413 = vmul.f32 1.0, %v412
    %v414 = vadd.f32 %v404, %v235
    %416 = vrot.lane.b32.xlu0 %v414, 112
    %v417 = vpop.permute.xlu0 %416
    %v419 = vmul.f32 %v413, %v417
    %421 = vrot.lane.b32.xlu0 %v419, 16
    %v422 = vpop.permute.xlu0 %421
    %v424 = vadd.f32 %v329, %v422
    %v425 = vtanh.pop %v424
    %v426 = vsub.f32 1.0, %v413
    %428 = vrot.lane.b32.xlu0 %v425, 120
    %v429 = vpop.permute.xlu0 %428
    %v431 = vmul.f32 %v426, %v429
    %v432 = vmul.f32 %v413, %v256
    %v433 = vadd.f32 %v431, %v432
    %s434 = scalar_lea.vmem %s0, 4
    %v435 = vld [vmem:[%s434] sm:$0x3]
    %v437 = vsel %vm70, %v435, 0
    %439 = vmatprep.subr.mxu0 0.0
    %440 = vmatpush1.msra.mxu0 %v51
    %441 = vmatprep.subr.mxu0 0.0
    %442 = vmatpush1.msra.mxu0 %v52
    %443 = vmatprep.subr.mxu0 0.0
    %444 = vmatpush1.msra.mxu0 %v53
    %445 = vmatprep.subr.mxu0 0.0
    %446 = vmatpush1.msra.mxu0 %v54
    %447 = vmatprep.subr.mxu0 0.0
    %448 = vmatpush1.msra.mxu0 %v55
    %449 = vmatprep.subr.mxu0 0.0
    %450 = vmatpush1.msra.mxu0 %v56
    %451 = vmatprep.subr.mxu0 0.0
    %452 = vmatpush1.msra.mxu0 %v57
    %453 = vmatprep.subr.mxu0 0.0
    %454 = vmatpush1.msra.mxu0 %v58
    %455 = vmatprep.subr.mxu0 0.0
    %456 = vmatpush1.msra.mxu0 %v76
    %457 = vmatprep.subr.mxu0 0.0
    %458 = vmatpush1.msra.mxu0 0.0
    %459 = vmatprep.subr.mxu0 0.0
    %460 = vmatpush1.msra.mxu0 0.0
    %461 = vmatprep.subr.mxu0 0.0
    %462 = vmatpush1.msra.mxu0 0.0
    %463 = vmatprep.subr.mxu0 0.0
    %464 = vmatpush1.msra.mxu0 0.0
    %465 = vmatprep.subr.mxu0 0.0
    %466 = vmatpush1.msra.mxu0 0.0
    %467 = vmatprep.subr.mxu0 0.0
    %468 = vmatpush1.msra.mxu0 0.0
    %469 = vmatprep.subr.mxu0 0.0
    %470 = vmatpush1.msra.mxu0 0.0
    %471 = vmatprep.subr.mxu0 0.0
    %472 = vmatpush1.msra.mxu0 0.0
    %473 = vmatprep.subr.mxu0 0.0
    %474 = vmatpush1.msra.mxu0 0.0
    %475 = vmatprep.subr.mxu0 0.0
    %476 = vmatpush1.msra.mxu0 0.0
    %477 = vmatprep.subr.mxu0 0.0
    %478 = vmatpush1.msra.mxu0 0.0
    %479 = vmatprep.subr.mxu0 0.0
    %480 = vmatpush1.msra.mxu0 0.0
    %481 = vmatprep.subr.mxu0 0.0
    %482 = vmatpush1.msra.mxu0 0.0
    %483 = vmatprep.subr.mxu0 0.0
    %484 = vmatpush1.msra.mxu0 0.0
    %485 = vmatprep.subr.mxu0 0.0
    %486 = vmatpush1.msra.mxu0 0.0
    %487 = vmatprep.subr.mxu0 0.0
    %488 = vmatpush1.msra.mxu0 0.0
    %489 = vmatprep.subr.mxu0 0.0
    %490 = vmatpush1.msra.mxu0 0.0
    %491 = vmatprep.subr.mxu0 0.0
    %492 = vmatpush1.msra.mxu0 0.0
    %493 = vmatprep.subr.mxu0 0.0
    %494 = vmatpush1.msra.mxu0 0.0
    %495 = vmatprep.subr.mxu0 0.0
    %496 = vmatpush1.msra.mxu0 0.0
    %497 = vmatprep.subr.mxu0 0.0
    %498 = vmatpush1.msra.mxu0 0.0
    %499 = vmatprep.subr.mxu0 0.0
    %500 = vmatpush1.msra.mxu0 0.0
    %501 = vmatprep.subr.mxu0 0.0
    %502 = vmatpush1.msra.mxu0 0.0
    %503 = vmatprep.mubr.f32.mxu0 0.0
    %504 = vmatmul.mubr.f32.gmra.mrb[0].mxu0 %v437
    %v505 = vpop.f32.mrb[0].mxu0
    %v506 = vadd.f32 %v68, %v505
    %v507 = vpop.f32.mrb[0].mxu0
    %508 = vdwg.mxu0
    %510 = vrot.lane.b32.xlu0 %v433, 120
    %v511 = vpop.permute.xlu0 %510
    %v512 = vsel %vm148, %v511, 0
    %514 = vmatprep.subr.mxu0 0.0
    %515 = vmatpush1.msra.mxu0 %v60
    %516 = vmatprep.subr.mxu0 0.0
    %517 = vmatpush1.msra.mxu0 0.0
    %518 = vmatprep.subr.mxu0 0.0
    %519 = vmatpush1.msra.mxu0 0.0
    %520 = vmatprep.subr.mxu0 0.0
    %521 = vmatpush1.msra.mxu0 0.0
    %522 = vmatprep.subr.mxu0 0.0
    %523 = vmatpush1.msra.mxu0 0.0
    %524 = vmatprep.subr.mxu0 0.0
    %525 = vmatpush1.msra.mxu0 0.0
    %526 = vmatprep.subr.mxu0 0.0
    %527 = vmatpush1.msra.mxu0 0.0
    %528 = vmatprep.subr.mxu0 0.0
    %529 = vmatpush1.msra.mxu0 0.0
    %530 = vmatprep.subr.mxu0 0.0
    %531 = vmatpush1.msra.mxu0 0.0
    %532 = vmatprep.subr.mxu0 0.0
    %533 = vmatpush1.msra.mxu0 0.0
    %534 = vmatprep.subr.mxu0 0.0
    %535 = vmatpush1.msra.mxu0 0.0
    %536 = vmatprep.subr.mxu0 0.0
    %537 = vmatpush1.msra.mxu0 0.0
    %538 = vmatprep.subr.mxu0 0.0
    %539 = vmatpush1.msra.mxu0 0.0
    %540 = vmatprep.subr.mxu0 0.0
    %541 = vmatpush1.msra.mxu0 0.0
    %542 = vmatprep.subr.mxu0 0.0
    %543 = vmatpush1.msra.mxu0 0.0
    %544 = vmatprep.subr.mxu0 0.0
    %545 = vmatpush1.msra.mxu0 0.0
    %546 = vmatprep.subr.mxu0 0.0
    %547 = vmatpush1.msra.mxu0 0.0
    %548 = vmatprep.subr.mxu0 0.0
    %549 = vmatpush1.msra.mxu0 0.0
    %550 = vmatprep.subr.mxu0 0.0
    %551 = vmatpush1.msra.mxu0 0.0
    %552 = vmatprep.subr.mxu0 0.0
    %553 = vmatpush1.msra.mxu0 0.0
    %554 = vmatprep.subr.mxu0 0.0
    %555 = vmatpush1.msra.mxu0 0.0
    %556 = vmatprep.subr.mxu0 0.0
    %557 = vmatpush1.msra.mxu0 0.0
    %558 = vmatprep.subr.mxu0 0.0
    %559 = vmatpush1.msra.mxu0 0.0
    %560 = vmatprep.subr.mxu0 0.0
    %561 = vmatpush1.msra.mxu0 0.0
    %562 = vmatprep.subr.mxu0 0.0
    %563 = vmatpush1.msra.mxu0 0.0
    %564 = vmatprep.subr.mxu0 0.0
    %565 = vmatpush1.msra.mxu0 0.0
    %566 = vmatprep.subr.mxu0 0.0
    %567 = vmatpush1.msra.mxu0 0.0
    %568 = vmatprep.subr.mxu0 0.0
    %569 = vmatpush1.msra.mxu0 0.0
    %570 = vmatprep.subr.mxu0 0.0
    %571 = vmatpush1.msra.mxu0 0.0
    %572 = vmatprep.subr.mxu0 0.0
    %573 = vmatpush1.msra.mxu0 0.0
    %574 = vmatprep.subr.mxu0 0.0
    %575 = vmatpush1.msra.mxu0 0.0
    %576 = vmatprep.subr.mxu0 0.0
    %577 = vmatpush1.msra.mxu0 0.0
    %578 = vmatprep.mubr.f32.mxu0 0.0
    %579 = vmatmul.mubr.f32.gmra.mrb[0].mxu0 %v512
    %v580 = vpop.f32.mrb[0].mxu0
    %v581 = vadd.f32 0.0, %v580
    %v582 = vpop.f32.mrb[0].mxu0
    %583 = vdwg.mxu0
    %v584 = vadd.f32 %v506, %v581
    %v585 = vxor.u32 %v584, 2147483648
    %v586 = vmul.f32 %v585, 1.442695
    %v587 = vpow.pop %v586
    %v588 = vadd.f32 %v587, 1.0
    %v589 = vrcp.pop %v588
    %v590 = vmul.f32 1.0, %v589
    %v591 = vadd.f32 %v581, %v235
    %593 = vrot.lane.b32.xlu0 %v591, 112
    %v594 = vpop.permute.xlu0 %593
    %v596 = vmul.f32 %v590, %v594
    %598 = vrot.lane.b32.xlu0 %v596, 16
    %v599 = vpop.permute.xlu0 %598
    %v601 = vadd.f32 %v506, %v599
    %v602 = vtanh.pop %v601
    %v603 = vsub.f32 1.0, %v590
    %605 = vrot.lane.b32.xlu0 %v602, 120
    %v606 = vpop.permute.xlu0 %605
    %v608 = vmul.f32 %v603, %v606
    %v609 = vmul.f32 %v590, %v433
    %v610 = vadd.f32 %v608, %v609
    %s611 = scalar_lea.vmem %s0, 6
    %v612 = vld [vmem:[%s611] sm:$0x3]
    %v614 = vsel %vm70, %v612, 0
    %616 = vmatprep.subr.mxu0 0.0
    %617 = vmatpush1.msra.mxu0 %v51
    %618 = vmatprep.subr.mxu0 0.0
    %619 = vmatpush1.msra.mxu0 %v52
    %620 = vmatprep.subr.mxu0 0.0
    %621 = vmatpush1.msra.mxu0 %v53
    %622 = vmatprep.subr.mxu0 0.0
    %623 = vmatpush1.msra.mxu0 %v54
    %624 = vmatprep.subr.mxu0 0.0
    %625 = vmatpush1.msra.mxu0 %v55
    %626 = vmatprep.subr.mxu0 0.0
    %627 = vmatpush1.msra.mxu0 %v56
    %628 = vmatprep.subr.mxu0 0.0
    %629 = vmatpush1.msra.mxu0 %v57
    %630 = vmatprep.subr.mxu0 0.0
    %631 = vmatpush1.msra.mxu0 %v58
    %632 = vmatprep.subr.mxu0 0.0
    %633 = vmatpush1.msra.mxu0 %v76
    %634 = vmatprep.subr.mxu0 0.0
    %635 = vmatpush1.msra.mxu0 0.0
    %636 = vmatprep.subr.mxu0 0.0
    %637 = vmatpush1.msra.mxu0 0.0
    %638 = vmatprep.subr.mxu0 0.0
    %639 = vmatpush1.msra.mxu0 0.0
    %640 = vmatprep.subr.mxu0 0.0
    %641 = vmatpush1.msra.mxu0 0.0
    %642 = vmatprep.subr.mxu0 0.0
    %643 = vmatpush1.msra.mxu0 0.0
    %644 = vmatprep.subr.mxu0 0.0
    %645 = vmatpush1.msra.mxu0 0.0
    %646 = vmatprep.subr.mxu0 0.0
    %647 = vmatpush1.msra.mxu0 0.0
    %648 = vmatprep.subr.mxu0 0.0
    %649 = vmatpush1.msra.mxu0 0.0
    %650 = vmatprep.subr.mxu0 0.0
    %651 = vmatpush1.msra.mxu0 0.0
    %652 = vmatprep.subr.mxu0 0.0
    %653 = vmatpush1.msra.mxu0 0.0
    %654 = vmatprep.subr.mxu0 0.0
    %655 = vmatpush1.msra.mxu0 0.0
    %656 = vmatprep.subr.mxu0 0.0
    %657 = vmatpush1.msra.mxu0 0.0
    %658 = vmatprep.subr.mxu0 0.0
    %659 = vmatpush1.msra.mxu0 0.0
    %660 = vmatprep.subr.mxu0 0.0
    %661 = vmatpush1.msra.mxu0 0.0
    %662 = vmatprep.subr.mxu0 0.0
    %663 = vmatpush1.msra.mxu0 0.0
    %664 = vmatprep.subr.mxu0 0.0
    %665 = vmatpush1.msra.mxu0 0.0
    %666 = vmatprep.subr.mxu0 0.0
    %667 = vmatpush1.msra.mxu0 0.0
    %668 = vmatprep.subr.mxu0 0.0
    %669 = vmatpush1.msra.mxu0 0.0
    %670 = vmatprep.subr.mxu0 0.0
    %671 = vmatpush1.msra.mxu0 0.0
    %672 = vmatprep.subr.mxu0 0.0
    %673 = vmatpush1.msra.mxu0 0.0
    %674 = vmatprep.subr.mxu0 0.0
    %675 = vmatpush1.msra.mxu0 0.0
    %676 = vmatprep.subr.mxu0 0.0
    %677 = vmatpush1.msra.mxu0 0.0
    %678 = vmatprep.subr.mxu0 0.0
    %679 = vmatpush1.msra.mxu0 0.0
    %680 = vmatprep.mubr.f32.mxu0 0.0
    %681 = vmatmul.mubr.f32.gmra.mrb[0].mxu0 %v614
    %v682 = vpop.f32.mrb[0].mxu0
    %v683 = vadd.f32 %v68, %v682
    %v684 = vpop.f32.mrb[0].mxu0
    %685 = vdwg.mxu0
    %687 = vrot.lane.b32.xlu0 %v610, 120
    %v688 = vpop.permute.xlu0 %687
    %v689 = vsel %vm148, %v688, 0
    %691 = vmatprep.subr.mxu0 0.0
    %692 = vmatpush1.msra.mxu0 %v60
    %693 = vmatprep.subr.mxu0 0.0
    %694 = vmatpush1.msra.mxu0 0.0
    %695 = vmatprep.subr.mxu0 0.0
    %696 = vmatpush1.msra.mxu0 0.0
    %697 = vmatprep.subr.mxu0 0.0
    %698 = vmatpush1.msra.mxu0 0.0
    %699 = vmatprep.subr.mxu0 0.0
    %700 = vmatpush1.msra.mxu0 0.0
    %701 = vmatprep.subr.mxu0 0.0
    %702 = vmatpush1.msra.mxu0 0.0
    %703 = vmatprep.subr.mxu0 0.0
    %704 = vmatpush1.msra.mxu0 0.0
    %705 = vmatprep.subr.mxu0 0.0
    %706 = vmatpush1.msra.mxu0 0.0
    %707 = vmatprep.subr.mxu0 0.0
    %708 = vmatpush1.msra.mxu0 0.0
    %709 = vmatprep.subr.mxu0 0.0
    %710 = vmatpush1.msra.mxu0 0.0
    %711 = vmatprep.subr.mxu0 0.0
    %712 = vmatpush1.msra.mxu0 0.0
    %713 = vmatprep.subr.mxu0 0.0
    %714 = vmatpush1.msra.mxu0 0.0
    %715 = vmatprep.subr.mxu0 0.0
    %716 = vmatpush1.msra.mxu0 0.0
    %717 = vmatprep.subr.mxu0 0.0
    %718 = vmatpush1.msra.mxu0 0.0
    %719 = vmatprep.subr.mxu0 0.0
    %720 = vmatpush1.msra.mxu0 0.0
    %721 = vmatprep.subr.mxu0 0.0
    %722 = vmatpush1.msra.mxu0 0.0
    %723 = vmatprep.subr.mxu0 0.0
    %724 = vmatpush1.msra.mxu0 0.0
    %725 = vmatprep.subr.mxu0 0.0
    %726 = vmatpush1.msra.mxu0 0.0
    %727 = vmatprep.subr.mxu0 0.0
    %728 = vmatpush1.msra.mxu0 0.0
    %729 = vmatprep.subr.mxu0 0.0
    %730 = vmatpush1.msra.mxu0 0.0
    %731 = vmatprep.subr.mxu0 0.0
    %732 = vmatpush1.msra.mxu0 0.0
    %733 = vmatprep.subr.mxu0 0.0
    %734 = vmatpush1.msra.mxu0 0.0
    %735 = vmatprep.subr.mxu0 0.0
    %736 = vmatpush1.msra.mxu0 0.0
    %737 = vmatprep.subr.mxu0 0.0
    %738 = vmatpush1.msra.mxu0 0.0
    %739 = vmatprep.subr.mxu0 0.0
    %740 = vmatpush1.msra.mxu0 0.0
    %741 = vmatprep.subr.mxu0 0.0
    %742 = vmatpush1.msra.mxu0 0.0
    %743 = vmatprep.subr.mxu0 0.0
    %744 = vmatpush1.msra.mxu0 0.0
    %745 = vmatprep.subr.mxu0 0.0
    %746 = vmatpush1.msra.mxu0 0.0
    %747 = vmatprep.subr.mxu0 0.0
    %748 = vmatpush1.msra.mxu0 0.0
    %749 = vmatprep.subr.mxu0 0.0
    %750 = vmatpush1.msra.mxu0 0.0
    %751 = vmatprep.subr.mxu0 0.0
    %752 = vmatpush1.msra.mxu0 0.0
    %753 = vmatprep.subr.mxu0 0.0
    %754 = vmatpush1.msra.mxu0 0.0
    %755 = vmatprep.mubr.f32.mxu0 0.0
    %756 = vmatmul.mubr.f32.gmra.mrb[0].mxu0 %v689
    %v757 = vpop.f32.mrb[0].mxu0
    %v758 = vadd.f32 0.0, %v757
    %v759 = vpop.f32.mrb[0].mxu0
    %760 = vdwg.mxu0
    %v761 = vadd.f32 %v683, %v758
    %v762 = vxor.u32 %v761, 2147483648
    %v763 = vmul.f32 %v762, 1.442695
    %v764 = vpow.pop %v763
    %v765 = vadd.f32 %v764, 1.0
    %v766 = vrcp.pop %v765
    %v767 = vmul.f32 1.0, %v766
    %v768 = vadd.f32 %v758, %v235
    %770 = vrot.lane.b32.xlu0 %v768, 112
    %v771 = vpop.permute.xlu0 %770
    %v773 = vmul.f32 %v767, %v771
    %775 = vrot.lane.b32.xlu0 %v773, 16
    %v776 = vpop.permute.xlu0 %775
    %v778 = vadd.f32 %v683, %v776
    %v779 = vtanh.pop %v778
    %v780 = vsub.f32 1.0, %v767
    %782 = vrot.lane.b32.xlu0 %v779, 120
    %v783 = vpop.permute.xlu0 %782
    %v785 = vmul.f32 %v780, %v783
    %v786 = vmul.f32 %v767, %v610
    %v787 = vadd.f32 %v785, %v786
    %s788 = scalar_lea.vmem %s0, 8
    %v789 = vld [vmem:[%s788] sm:$0x3]
    %v791 = vsel %vm70, %v789, 0
    %793 = vmatprep.subr.mxu0 0.0
    %794 = vmatpush1.msra.mxu0 %v51
    %795 = vmatprep.subr.mxu0 0.0
    %796 = vmatpush1.msra.mxu0 %v52
    %797 = vmatprep.subr.mxu0 0.0
    %798 = vmatpush1.msra.mxu0 %v53
    %799 = vmatprep.subr.mxu0 0.0
    %800 = vmatpush1.msra.mxu0 %v54
    %801 = vmatprep.subr.mxu0 0.0
    %802 = vmatpush1.msra.mxu0 %v55
    %803 = vmatprep.subr.mxu0 0.0
    %804 = vmatpush1.msra.mxu0 %v56
    %805 = vmatprep.subr.mxu0 0.0
    %806 = vmatpush1.msra.mxu0 %v57
    %807 = vmatprep.subr.mxu0 0.0
    %808 = vmatpush1.msra.mxu0 %v58
    %809 = vmatprep.subr.mxu0 0.0
    %810 = vmatpush1.msra.mxu0 %v76
    %811 = vmatprep.subr.mxu0 0.0
    %812 = vmatpush1.msra.mxu0 0.0
    %813 = vmatprep.subr.mxu0 0.0
    %814 = vmatpush1.msra.mxu0 0.0
    %815 = vmatprep.subr.mxu0 0.0
    %816 = vmatpush1.msra.mxu0 0.0
    %817 = vmatprep.subr.mxu0 0.0
    %818 = vmatpush1.msra.mxu0 0.0
    %819 = vmatprep.subr.mxu0 0.0
    %820 = vmatpush1.msra.mxu0 0.0
    %821 = vmatprep.subr.mxu0 0.0
    %822 = vmatpush1.msra.mxu0 0.0
    %823 = vmatprep.subr.mxu0 0.0
    %824 = vmatpush1.msra.mxu0 0.0
    %825 = vmatprep.subr.mxu0 0.0
    %826 = vmatpush1.msra.mxu0 0.0
    %827 = vmatprep.subr.mxu0 0.0
    %828 = vmatpush1.msra.mxu0 0.0
    %829 = vmatprep.subr.mxu0 0.0
    %830 = vmatpush1.msra.mxu0 0.0
    %831 = vmatprep.subr.mxu0 0.0
    %832 = vmatpush1.msra.mxu0 0.0
    %833 = vmatprep.subr.mxu0 0.0
    %834 = vmatpush1.msra.mxu0 0.0
    %835 = vmatprep.subr.mxu0 0.0
    %836 = vmatpush1.msra.mxu0 0.0
    %837 = vmatprep.subr.mxu0 0.0
    %838 = vmatpush1.msra.mxu0 0.0
    %839 = vmatprep.subr.mxu0 0.0
    %840 = vmatpush1.msra.mxu0 0.0
    %841 = vmatprep.subr.mxu0 0.0
    %842 = vmatpush1.msra.mxu0 0.0
    %843 = vmatprep.subr.mxu0 0.0
    %844 = vmatpush1.msra.mxu0 0.0
    %845 = vmatprep.subr.mxu0 0.0
    %846 = vmatpush1.msra.mxu0 0.0
    %847 = vmatprep.subr.mxu0 0.0
    %848 = vmatpush1.msra.mxu0 0.0
    %849 = vmatprep.subr.mxu0 0.0
    %850 = vmatpush1.msra.mxu0 0.0
    %851 = vmatprep.subr.mxu0 0.0
    %852 = vmatpush1.msra.mxu0 0.0
    %853 = vmatprep.subr.mxu0 0.0
    %854 = vmatpush1.msra.mxu0 0.0
    %855 = vmatprep.subr.mxu0 0.0
    %856 = vmatpush1.msra.mxu0 0.0
    %857 = vmatprep.mubr.f32.mxu0 0.0
    %858 = vmatmul.mubr.f32.gmra.mrb[0].mxu0 %v791
    %v859 = vpop.f32.mrb[0].mxu0
    %v860 = vadd.f32 %v68, %v859
    %v861 = vpop.f32.mrb[0].mxu0
    %862 = vdwg.mxu0
    %864 = vrot.lane.b32.xlu0 %v787, 120
    %v865 = vpop.permute.xlu0 %864
    %v866 = vsel %vm148, %v865, 0
    %868 = vmatprep.subr.mxu0 0.0
    %869 = vmatpush1.msra.mxu0 %v60
    %870 = vmatprep.subr.mxu0 0.0
    %871 = vmatpush1.msra.mxu0 0.0
    %872 = vmatprep.subr.mxu0 0.0
    %873 = vmatpush1.msra.mxu0 0.0
    %874 = vmatprep.subr.mxu0 0.0
    %875 = vmatpush1.msra.mxu0 0.0
    %876 = vmatprep.subr.mxu0 0.0
    %877 = vmatpush1.msra.mxu0 0.0
    %878 = vmatprep.subr.mxu0 0.0
    %879 = vmatpush1.msra.mxu0 0.0
    %880 = vmatprep.subr.mxu0 0.0
    %881 = vmatpush1.msra.mxu0 0.0
    %882 = vmatprep.subr.mxu0 0.0
    %883 = vmatpush1.msra.mxu0 0.0
    %884 = vmatprep.subr.mxu0 0.0
    %885 = vmatpush1.msra.mxu0 0.0
    %886 = vmatprep.subr.mxu0 0.0
    %887 = vmatpush1.msra.mxu0 0.0
    %888 = vmatprep.subr.mxu0 0.0
    %889 = vmatpush1.msra.mxu0 0.0
    %890 = vmatprep.subr.mxu0 0.0
    %891 = vmatpush1.msra.mxu0 0.0
    %892 = vmatprep.subr.mxu0 0.0
    %893 = vmatpush1.msra.mxu0 0.0
    %894 = vmatprep.subr.mxu0 0.0
    %895 = vmatpush1.msra.mxu0 0.0
    %896 = vmatprep.subr.mxu0 0.0
    %897 = vmatpush1.msra.mxu0 0.0
    %898 = vmatprep.subr.mxu0 0.0
    %899 = vmatpush1.msra.mxu0 0.0
    %900 = vmatprep.subr.mxu0 0.0
    %901 = vmatpush1.msra.mxu0 0.0
    %902 = vmatprep.subr.mxu0 0.0
    %903 = vmatpush1.msra.mxu0 0.0
    %904 = vmatprep.subr.mxu0 0.0
    %905 = vmatpush1.msra.mxu0 0.0
    %906 = vmatprep.subr.mxu0 0.0
    %907 = vmatpush1.msra.mxu0 0.0
    %908 = vmatprep.subr.mxu0 0.0
    %909 = vmatpush1.msra.mxu0 0.0
    %910 = vmatprep.subr.mxu0 0.0
    %911 = vmatpush1.msra.mxu0 0.0
    %912 = vmatprep.subr.mxu0 0.0
    %913 = vmatpush1.msra.mxu0 0.0
    %914 = vmatprep.subr.mxu0 0.0
    %915 = vmatpush1.msra.mxu0 0.0
    %916 = vmatprep.subr.mxu0 0.0
    %917 = vmatpush1.msra.mxu0 0.0
    %918 = vmatprep.subr.mxu0 0.0
    %919 = vmatpush1.msra.mxu0 0.0
    %920 = vmatprep.subr.mxu0 0.0
    %921 = vmatpush1.msra.mxu0 0.0
    %922 = vmatprep.subr.mxu0 0.0
    %923 = vmatpush1.msra.mxu0 0.0
    %924 = vmatprep.subr.mxu0 0.0
    %925 = vmatpush1.msra.mxu0 0.0
    %926 = vmatprep.subr.mxu0 0.0
    %927 = vmatpush1.msra.mxu0 0.0
    %928 = vmatprep.subr.mxu0 0.0
    %929 = vmatpush1.msra.mxu0 0.0
    %930 = vmatprep.subr.mxu0 0.0
    %931 = vmatpush1.msra.mxu0 0.0
    %932 = vmatprep.mubr.f32.mxu0 0.0
    %933 = vmatmul.mubr.f32.gmra.mrb[0].mxu0 %v866
    %v934 = vpop.f32.mrb[0].mxu0
    %v935 = vadd.f32 0.0, %v934
    %v936 = vpop.f32.mrb[0].mxu0
    %937 = vdwg.mxu0
    %v938 = vadd.f32 %v860, %v935
    %v939 = vxor.u32 %v938, 2147483648
    %v940 = vmul.f32 %v939, 1.442695
    %v941 = vpow.pop %v940
    %v942 = vadd.f32 %v941, 1.0
    %v943 = vrcp.pop %v942
    %v944 = vmul.f32 1.0, %v943
    %v945 = vadd.f32 %v935, %v235
    %947 = vrot.lane.b32.xlu0 %v945, 112
    %v948 = vpop.permute.xlu0 %947
    %v950 = vmul.f32 %v944, %v948
    %952 = vrot.lane.b32.xlu0 %v950, 16
    %v953 = vpop.permute.xlu0 %952
    %v955 = vadd.f32 %v860, %v953
    %v956 = vtanh.pop %v955
    %v957 = vsub.f32 1.0, %v944
    %959 = vrot.lane.b32.xlu0 %v956, 120
    %v960 = vpop.permute.xlu0 %959
    %v962 = vmul.f32 %v957, %v960
    %v963 = vmul.f32 %v944, %v787
    %v964 = vadd.f32 %v962, %v963
    %s965 = scalar_lea.vmem %s0, 10
    %v966 = vld [vmem:[%s965] sm:$0x3]
    %v968 = vsel %vm70, %v966, 0
    %970 = vmatprep.subr.mxu0 0.0
    %971 = vmatpush1.msra.mxu0 %v51
    %972 = vmatprep.subr.mxu0 0.0
    %973 = vmatpush1.msra.mxu0 %v52
    %974 = vmatprep.subr.mxu0 0.0
    %975 = vmatpush1.msra.mxu0 %v53
    %976 = vmatprep.subr.mxu0 0.0
    %977 = vmatpush1.msra.mxu0 %v54
    %978 = vmatprep.subr.mxu0 0.0
    %979 = vmatpush1.msra.mxu0 %v55
    %980 = vmatprep.subr.mxu0 0.0
    %981 = vmatpush1.msra.mxu0 %v56
    %982 = vmatprep.subr.mxu0 0.0
    %983 = vmatpush1.msra.mxu0 %v57
    %984 = vmatprep.subr.mxu0 0.0
    %985 = vmatpush1.msra.mxu0 %v58
    %986 = vmatprep.subr.mxu0 0.0
    %987 = vmatpush1.msra.mxu0 %v76
    %988 = vmatprep.subr.mxu0 0.0
    %989 = vmatpush1.msra.mxu0 0.0
    %990 = vmatprep.subr.mxu0 0.0
    %991 = vmatpush1.msra.mxu0 0.0
    %992 = vmatprep.subr.mxu0 0.0
    %993 = vmatpush1.msra.mxu0 0.0
    %994 = vmatprep.subr.mxu0 0.0
    %995 = vmatpush1.msra.mxu0 0.0
    %996 = vmatprep.subr.mxu0 0.0
    %997 = vmatpush1.msra.mxu0 0.0
    %998 = vmatprep.subr.mxu0 0.0
    %999 = vmatpush1.msra.mxu0 0.0
    %1000 = vmatprep.subr.mxu0 0.0
    %1001 = vmatpush1.msra.mxu0 0.0
    %1002 = vmatprep.subr.mxu0 0.0
    %1003 = vmatpush1.msra.mxu0 0.0
    %1004 = vmatprep.subr.mxu0 0.0
    %1005 = vmatpush1.msra.mxu0 0.0
    %1006 = vmatprep.subr.mxu0 0.0
    %1007 = vmatpush1.msra.mxu0 0.0
    %1008 = vmatprep.subr.mxu0 0.0
    %1009 = vmatpush1.msra.mxu0 0.0
    %1010 = vmatprep.subr.mxu0 0.0
    %1011 = vmatpush1.msra.mxu0 0.0
    %1012 = vmatprep.subr.mxu0 0.0
    %1013 = vmatpush1.msra.mxu0 0.0
    %1014 = vmatprep.subr.mxu0 0.0
    %1015 = vmatpush1.msra.mxu0 0.0
    %1016 = vmatprep.subr.mxu0 0.0
    %1017 = vmatpush1.msra.mxu0 0.0
    %1018 = vmatprep.subr.mxu0 0.0
    %1019 = vmatpush1.msra.mxu0 0.0
    %1020 = vmatprep.subr.mxu0 0.0
    %1021 = vmatpush1.msra.mxu0 0.0
    %1022 = vmatprep.subr.mxu0 0.0
    %1023 = vmatpush1.msra.mxu0 0.0
    %1024 = vmatprep.subr.mxu0 0.0
    %1025 = vmatpush1.msra.mxu0 0.0
    %1026 = vmatprep.subr.mxu0 0.0
    %1027 = vmatpush1.msra.mxu0 0.0
    %1028 = vmatprep.subr.mxu0 0.0
    %1029 = vmatpush1.msra.mxu0 0.0
    %1030 = vmatprep.subr.mxu0 0.0
    %1031 = vmatpush1.msra.mxu0 0.0
    %1032 = vmatprep.subr.mxu0 0.0
    %1033 = vmatpush1.msra.mxu0 0.0
    %1034 = vmatprep.mubr.f32.mxu0 0.0
    %1035 = vmatmul.mubr.f32.gmra.mrb[0].mxu0 %v968
    %v1036 = vpop.f32.mrb[0].mxu0
    %v1037 = vadd.f32 %v68, %v1036
    %v1038 = vpop.f32.mrb[0].mxu0
    %1039 = vdwg.mxu0
    %1041 = vrot.lane.b32.xlu0 %v964, 120
    %v1042 = vpop.permute.xlu0 %1041
    %v1043 = vsel %vm148, %v1042, 0
    %1045 = vmatprep.subr.mxu0 0.0
    %1046 = vmatpush1.msra.mxu0 %v60
    %1047 = vmatprep.subr.mxu0 0.0
    %1048 = vmatpush1.msra.mxu0 0.0
    %1049 = vmatprep.subr.mxu0 0.0
    %1050 = vmatpush1.msra.mxu0 0.0
    %1051 = vmatprep.subr.mxu0 0.0
    %1052 = vmatpush1.msra.mxu0 0.0
    %1053 = vmatprep.subr.mxu0 0.0
    %1054 = vmatpush1.msra.mxu0 0.0
    %1055 = vmatprep.subr.mxu0 0.0
    %1056 = vmatpush1.msra.mxu0 0.0
    %1057 = vmatprep.subr.mxu0 0.0
    %1058 = vmatpush1.msra.mxu0 0.0
    %1059 = vmatprep.subr.mxu0 0.0
    %1060 = vmatpush1.msra.mxu0 0.0
    %1061 = vmatprep.subr.mxu0 0.0
    %1062 = vmatpush1.msra.mxu0 0.0
    %1063 = vmatprep.subr.mxu0 0.0
    %1064 = vmatpush1.msra.mxu0 0.0
    %1065 = vmatprep.subr.mxu0 0.0
    %1066 = vmatpush1.msra.mxu0 0.0
    %1067 = vmatprep.subr.mxu0 0.0
    %1068 = vmatpush1.msra.mxu0 0.0
    %1069 = vmatprep.subr.mxu0 0.0
    %1070 = vmatpush1.msra.mxu0 0.0
    %1071 = vmatprep.subr.mxu0 0.0
    %1072 = vmatpush1.msra.mxu0 0.0
    %1073 = vmatprep.subr.mxu0 0.0
    %1074 = vmatpush1.msra.mxu0 0.0
    %1075 = vmatprep.subr.mxu0 0.0
    %1076 = vmatpush1.msra.mxu0 0.0
    %1077 = vmatprep.subr.mxu0 0.0
    %1078 = vmatpush1.msra.mxu0 0.0
    %1079 = vmatprep.subr.mxu0 0.0
    %1080 = vmatpush1.msra.mxu0 0.0
    %1081 = vmatprep.subr.mxu0 0.0
    %1082 = vmatpush1.msra.mxu0 0.0
    %1083 = vmatprep.subr.mxu0 0.0
    %1084 = vmatpush1.msra.mxu0 0.0
    %1085 = vmatprep.subr.mxu0 0.0
    %1086 = vmatpush1.msra.mxu0 0.0
    %1087 = vmatprep.subr.mxu0 0.0
    %1088 = vmatpush1.msra.mxu0 0.0
    %1089 = vmatprep.subr.mxu0 0.0
    %1090 = vmatpush1.msra.mxu0 0.0
    %1091 = vmatprep.subr.mxu0 0.0
    %1092 = vmatpush1.msra.mxu0 0.0
    %1093 = vmatprep.subr.mxu0 0.0
    %1094 = vmatpush1.msra.mxu0 0.0
    %1095 = vmatprep.subr.mxu0 0.0
    %1096 = vmatpush1.msra.mxu0 0.0
    %1097 = vmatprep.subr.mxu0 0.0
    %1098 = vmatpush1.msra.mxu0 0.0
    %1099 = vmatprep.subr.mxu0 0.0
    %1100 = vmatpush1.msra.mxu0 0.0
    %1101 = vmatprep.subr.mxu0 0.0
    %1102 = vmatpush1.msra.mxu0 0.0
    %1103 = vmatprep.subr.mxu0 0.0
    %1104 = vmatpush1.msra.mxu0 0.0
    %1105 = vmatprep.subr.mxu0 0.0
    %1106 = vmatpush1.msra.mxu0 0.0
    %1107 = vmatprep.subr.mxu0 0.0
    %1108 = vmatpush1.msra.mxu0 0.0
    %1109 = vmatprep.mubr.f32.mxu0 0.0
    %1110 = vmatmul.mubr.f32.gmra.mrb[0].mxu0 %v1043
    %v1111 = vpop.f32.mrb[0].mxu0
    %v1112 = vadd.f32 0.0, %v1111
    %v1113 = vpop.f32.mrb[0].mxu0
    %1114 = vdwg.mxu0
    %v1115 = vadd.f32 %v1037, %v1112
    %v1116 = vxor.u32 %v1115, 2147483648
    %v1117 = vmul.f32 %v1116, 1.442695
    %v1118 = vpow.pop %v1117
    %v1119 = vadd.f32 %v1118, 1.0
    %v1120 = vrcp.pop %v1119
    %v1121 = vmul.f32 1.0, %v1120
    %v1122 = vadd.f32 %v1112, %v235
    %1124 = vrot.lane.b32.xlu0 %v1122, 112
    %v1125 = vpop.permute.xlu0 %1124
    %v1127 = vmul.f32 %v1121, %v1125
    %1129 = vrot.lane.b32.xlu0 %v1127, 16
    %v1130 = vpop.permute.xlu0 %1129
    %v1132 = vadd.f32 %v1037, %v1130
    %v1133 = vtanh.pop %v1132
    %v1134 = vsub.f32 1.0, %v1121
    %1136 = vrot.lane.b32.xlu0 %v1133, 120
    %v1137 = vpop.permute.xlu0 %1136
    %v1139 = vmul.f32 %v1134, %v1137
    %v1140 = vmul.f32 %v1121, %v964
    %v1141 = vadd.f32 %v1139, %v1140
    %s1142 = scalar_lea.vmem %s0, 12
    %v1143 = vld [vmem:[%s1142] sm:$0x3]
    %v1145 = vsel %vm70, %v1143, 0
    %1147 = vmatprep.subr.mxu0 0.0
    %1148 = vmatpush1.msra.mxu0 %v51
    %1149 = vmatprep.subr.mxu0 0.0
    %1150 = vmatpush1.msra.mxu0 %v52
    %1151 = vmatprep.subr.mxu0 0.0
    %1152 = vmatpush1.msra.mxu0 %v53
    %1153 = vmatprep.subr.mxu0 0.0
    %1154 = vmatpush1.msra.mxu0 %v54
    %1155 = vmatprep.subr.mxu0 0.0
    %1156 = vmatpush1.msra.mxu0 %v55
    %1157 = vmatprep.subr.mxu0 0.0
    %1158 = vmatpush1.msra.mxu0 %v56
    %1159 = vmatprep.subr.mxu0 0.0
    %1160 = vmatpush1.msra.mxu0 %v57
    %1161 = vmatprep.subr.mxu0 0.0
    %1162 = vmatpush1.msra.mxu0 %v58
    %1163 = vmatprep.subr.mxu0 0.0
    %1164 = vmatpush1.msra.mxu0 %v76
    %1165 = vmatprep.subr.mxu0 0.0
    %1166 = vmatpush1.msra.mxu0 0.0
    %1167 = vmatprep.subr.mxu0 0.0
    %1168 = vmatpush1.msra.mxu0 0.0
    %1169 = vmatprep.subr.mxu0 0.0
    %1170 = vmatpush1.msra.mxu0 0.0
    %1171 = vmatprep.subr.mxu0 0.0
    %1172 = vmatpush1.msra.mxu0 0.0
    %1173 = vmatprep.subr.mxu0 0.0
    %1174 = vmatpush1.msra.mxu0 0.0
    %1175 = vmatprep.subr.mxu0 0.0
    %1176 = vmatpush1.msra.mxu0 0.0
    %1177 = vmatprep.subr.mxu0 0.0
    %1178 = vmatpush1.msra.mxu0 0.0
    %1179 = vmatprep.subr.mxu0 0.0
    %1180 = vmatpush1.msra.mxu0 0.0
    %1181 = vmatprep.subr.mxu0 0.0
    %1182 = vmatpush1.msra.mxu0 0.0
    %1183 = vmatprep.subr.mxu0 0.0
    %1184 = vmatpush1.msra.mxu0 0.0
    %1185 = vmatprep.subr.mxu0 0.0
    %1186 = vmatpush1.msra.mxu0 0.0
    %1187 = vmatprep.subr.mxu0 0.0
    %1188 = vmatpush1.msra.mxu0 0.0
    %1189 = vmatprep.subr.mxu0 0.0
    %1190 = vmatpush1.msra.mxu0 0.0
    %1191 = vmatprep.subr.mxu0 0.0
    %1192 = vmatpush1.msra.mxu0 0.0
    %1193 = vmatprep.subr.mxu0 0.0
    %1194 = vmatpush1.msra.mxu0 0.0
    %1195 = vmatprep.subr.mxu0 0.0
    %1196 = vmatpush1.msra.mxu0 0.0
    %1197 = vmatprep.subr.mxu0 0.0
    %1198 = vmatpush1.msra.mxu0 0.0
    %1199 = vmatprep.subr.mxu0 0.0
    %1200 = vmatpush1.msra.mxu0 0.0
    %1201 = vmatprep.subr.mxu0 0.0
    %1202 = vmatpush1.msra.mxu0 0.0
    %1203 = vmatprep.subr.mxu0 0.0
    %1204 = vmatpush1.msra.mxu0 0.0
    %1205 = vmatprep.subr.mxu0 0.0
    %1206 = vmatpush1.msra.mxu0 0.0
    %1207 = vmatprep.subr.mxu0 0.0
    %1208 = vmatpush1.msra.mxu0 0.0
    %1209 = vmatprep.subr.mxu0 0.0
    %1210 = vmatpush1.msra.mxu0 0.0
    %1211 = vmatprep.mubr.f32.mxu0 0.0
    %1212 = vmatmul.mubr.f32.gmra.mrb[0].mxu0 %v1145
    %v1213 = vpop.f32.mrb[0].mxu0
    %v1214 = vadd.f32 %v68, %v1213
    %v1215 = vpop.f32.mrb[0].mxu0
    %1216 = vdwg.mxu0
    %1218 = vrot.lane.b32.xlu0 %v1141, 120
    %v1219 = vpop.permute.xlu0 %1218
    %v1220 = vsel %vm148, %v1219, 0
    %1222 = vmatprep.subr.mxu0 0.0
    %1223 = vmatpush1.msra.mxu0 %v60
    %1224 = vmatprep.subr.mxu0 0.0
    %1225 = vmatpush1.msra.mxu0 0.0
    %1226 = vmatprep.subr.mxu0 0.0
    %1227 = vmatpush1.msra.mxu0 0.0
    %1228 = vmatprep.subr.mxu0 0.0
    %1229 = vmatpush1.msra.mxu0 0.0
    %1230 = vmatprep.subr.mxu0 0.0
    %1231 = vmatpush1.msra.mxu0 0.0
    %1232 = vmatprep.subr.mxu0 0.0
    %1233 = vmatpush1.msra.mxu0 0.0
    %1234 = vmatprep.subr.mxu0 0.0
    %1235 = vmatpush1.msra.mxu0 0.0
    %1236 = vmatprep.subr.mxu0 0.0
    %1237 = vmatpush1.msra.mxu0 0.0
    %1238 = vmatprep.subr.mxu0 0.0
    %1239 = vmatpush1.msra.mxu0 0.0
    %1240 = vmatprep.subr.mxu0 0.0
    %1241 = vmatpush1.msra.mxu0 0.0
    %1242 = vmatprep.subr.mxu0 0.0
    %1243 = vmatpush1.msra.mxu0 0.0
    %1244 = vmatprep.subr.mxu0 0.0
    %1245 = vmatpush1.msra.mxu0 0.0
    %1246 = vmatprep.subr.mxu0 0.0
    %1247 = vmatpush1.msra.mxu0 0.0
    %1248 = vmatprep.subr.mxu0 0.0
    %1249 = vmatpush1.msra.mxu0 0.0
    %1250 = vmatprep.subr.mxu0 0.0
    %1251 = vmatpush1.msra.mxu0 0.0
    %1252 = vmatprep.subr.mxu0 0.0
    %1253 = vmatpush1.msra.mxu0 0.0
    %1254 = vmatprep.subr.mxu0 0.0
    %1255 = vmatpush1.msra.mxu0 0.0
    %1256 = vmatprep.subr.mxu0 0.0
    %1257 = vmatpush1.msra.mxu0 0.0
    %1258 = vmatprep.subr.mxu0 0.0
    %1259 = vmatpush1.msra.mxu0 0.0
    %1260 = vmatprep.subr.mxu0 0.0
    %1261 = vmatpush1.msra.mxu0 0.0
    %1262 = vmatprep.subr.mxu0 0.0
    %1263 = vmatpush1.msra.mxu0 0.0
    %1264 = vmatprep.subr.mxu0 0.0
    %1265 = vmatpush1.msra.mxu0 0.0
    %1266 = vmatprep.subr.mxu0 0.0
    %1267 = vmatpush1.msra.mxu0 0.0
    %1268 = vmatprep.subr.mxu0 0.0
    %1269 = vmatpush1.msra.mxu0 0.0
    %1270 = vmatprep.subr.mxu0 0.0
    %1271 = vmatpush1.msra.mxu0 0.0
    %1272 = vmatprep.subr.mxu0 0.0
    %1273 = vmatpush1.msra.mxu0 0.0
    %1274 = vmatprep.subr.mxu0 0.0
    %1275 = vmatpush1.msra.mxu0 0.0
    %1276 = vmatprep.subr.mxu0 0.0
    %1277 = vmatpush1.msra.mxu0 0.0
    %1278 = vmatprep.subr.mxu0 0.0
    %1279 = vmatpush1.msra.mxu0 0.0
    %1280 = vmatprep.subr.mxu0 0.0
    %1281 = vmatpush1.msra.mxu0 0.0
    %1282 = vmatprep.subr.mxu0 0.0
    %1283 = vmatpush1.msra.mxu0 0.0
    %1284 = vmatprep.subr.mxu0 0.0
    %1285 = vmatpush1.msra.mxu0 0.0
    %1286 = vmatprep.mubr.f32.mxu0 0.0
    %1287 = vmatmul.mubr.f32.gmra.mrb[0].mxu0 %v1220
    %v1288 = vpop.f32.mrb[0].mxu0
    %v1289 = vadd.f32 0.0, %v1288
    %v1290 = vpop.f32.mrb[0].mxu0
    %1291 = vdwg.mxu0
    %v1292 = vadd.f32 %v1214, %v1289
    %v1293 = vxor.u32 %v1292, 2147483648
    %v1294 = vmul.f32 %v1293, 1.442695
    %v1295 = vpow.pop %v1294
    %v1296 = vadd.f32 %v1295, 1.0
    %v1297 = vrcp.pop %v1296
    %v1298 = vmul.f32 1.0, %v1297
    %v1299 = vadd.f32 %v1289, %v235
    %1301 = vrot.lane.b32.xlu0 %v1299, 112
    %v1302 = vpop.permute.xlu0 %1301
    %v1304 = vmul.f32 %v1298, %v1302
    %1306 = vrot.lane.b32.xlu0 %v1304, 16
    %v1307 = vpop.permute.xlu0 %1306
    %v1309 = vadd.f32 %v1214, %v1307
    %v1310 = vtanh.pop %v1309
    %v1311 = vsub.f32 1.0, %v1298
    %1313 = vrot.lane.b32.xlu0 %v1310, 120
    %v1314 = vpop.permute.xlu0 %1313
    %v1316 = vmul.f32 %v1311, %v1314
    %v1317 = vmul.f32 %v1298, %v1141
    %v1318 = vadd.f32 %v1316, %v1317
    %s1319 = scalar_lea.vmem %s0, 14
    %v1320 = vld [vmem:[%s1319] sm:$0x3]
    %v1322 = vsel %vm70, %v1320, 0
    %1324 = vmatprep.subr.mxu0 0.0
    %1325 = vmatpush1.msra.mxu0 %v51
    %1326 = vmatprep.subr.mxu0 0.0
    %1327 = vmatpush1.msra.mxu0 %v52
    %1328 = vmatprep.subr.mxu0 0.0
    %1329 = vmatpush1.msra.mxu0 %v53
    %1330 = vmatprep.subr.mxu0 0.0
    %1331 = vmatpush1.msra.mxu0 %v54
    %1332 = vmatprep.subr.mxu0 0.0
    %1333 = vmatpush1.msra.mxu0 %v55
    %1334 = vmatprep.subr.mxu0 0.0
    %1335 = vmatpush1.msra.mxu0 %v56
    %1336 = vmatprep.subr.mxu0 0.0
    %1337 = vmatpush1.msra.mxu0 %v57
    %1338 = vmatprep.subr.mxu0 0.0
    %1339 = vmatpush1.msra.mxu0 %v58
    %1340 = vmatprep.subr.mxu0 0.0
    %1341 = vmatpush1.msra.mxu0 %v76
    %1342 = vmatprep.subr.mxu0 0.0
    %1343 = vmatpush1.msra.mxu0 0.0
    %1344 = vmatprep.subr.mxu0 0.0
    %1345 = vmatpush1.msra.mxu0 0.0
    %1346 = vmatprep.subr.mxu0 0.0
    %1347 = vmatpush1.msra.mxu0 0.0
    %1348 = vmatprep.subr.mxu0 0.0
    %1349 = vmatpush1.msra.mxu0 0.0
    %1350 = vmatprep.subr.mxu0 0.0
    %1351 = vmatpush1.msra.mxu0 0.0
    %1352 = vmatprep.subr.mxu0 0.0
    %1353 = vmatpush1.msra.mxu0 0.0
    %1354 = vmatprep.subr.mxu0 0.0
    %1355 = vmatpush1.msra.mxu0 0.0
    %1356 = vmatprep.subr.mxu0 0.0
    %1357 = vmatpush1.msra.mxu0 0.0
    %1358 = vmatprep.subr.mxu0 0.0
    %1359 = vmatpush1.msra.mxu0 0.0
    %1360 = vmatprep.subr.mxu0 0.0
    %1361 = vmatpush1.msra.mxu0 0.0
    %1362 = vmatprep.subr.mxu0 0.0
    %1363 = vmatpush1.msra.mxu0 0.0
    %1364 = vmatprep.subr.mxu0 0.0
    %1365 = vmatpush1.msra.mxu0 0.0
    %1366 = vmatprep.subr.mxu0 0.0
    %1367 = vmatpush1.msra.mxu0 0.0
    %1368 = vmatprep.subr.mxu0 0.0
    %1369 = vmatpush1.msra.mxu0 0.0
    %1370 = vmatprep.subr.mxu0 0.0
    %1371 = vmatpush1.msra.mxu0 0.0
    %1372 = vmatprep.subr.mxu0 0.0
    %1373 = vmatpush1.msra.mxu0 0.0
    %1374 = vmatprep.subr.mxu0 0.0
    %1375 = vmatpush1.msra.mxu0 0.0
    %1376 = vmatprep.subr.mxu0 0.0
    %1377 = vmatpush1.msra.mxu0 0.0
    %1378 = vmatprep.subr.mxu0 0.0
    %1379 = vmatpush1.msra.mxu0 0.0
    %1380 = vmatprep.subr.mxu0 0.0
    %1381 = vmatpush1.msra.mxu0 0.0
    %1382 = vmatprep.subr.mxu0 0.0
    %1383 = vmatpush1.msra.mxu0 0.0
    %1384 = vmatprep.subr.mxu0 0.0
    %1385 = vmatpush1.msra.mxu0 0.0
    %1386 = vmatprep.subr.mxu0 0.0
    %1387 = vmatpush1.msra.mxu0 0.0
    %1388 = vmatprep.mubr.f32.mxu0 0.0
    %1389 = vmatmul.mubr.f32.gmra.mrb[0].mxu0 %v1322
    %v1390 = vpop.f32.mrb[0].mxu0
    %v1391 = vadd.f32 %v68, %v1390
    %v1392 = vpop.f32.mrb[0].mxu0
    %1393 = vdwg.mxu0
    %1395 = vrot.lane.b32.xlu0 %v1318, 120
    %v1396 = vpop.permute.xlu0 %1395
    %v1397 = vsel %vm148, %v1396, 0
    %1399 = vmatprep.subr.mxu0 0.0
    %1400 = vmatpush1.msra.mxu0 %v60
    %1401 = vmatprep.subr.mxu0 0.0
    %1402 = vmatpush1.msra.mxu0 0.0
    %1403 = vmatprep.subr.mxu0 0.0
    %1404 = vmatpush1.msra.mxu0 0.0
    %1405 = vmatprep.subr.mxu0 0.0
    %1406 = vmatpush1.msra.mxu0 0.0
    %1407 = vmatprep.subr.mxu0 0.0
    %1408 = vmatpush1.msra.mxu0 0.0
    %1409 = vmatprep.subr.mxu0 0.0
    %1410 = vmatpush1.msra.mxu0 0.0
    %1411 = vmatprep.subr.mxu0 0.0
    %1412 = vmatpush1.msra.mxu0 0.0
    %1413 = vmatprep.subr.mxu0 0.0
    %1414 = vmatpush1.msra.mxu0 0.0
    %1415 = vmatprep.subr.mxu0 0.0
    %1416 = vmatpush1.msra.mxu0 0.0
    %1417 = vmatprep.subr.mxu0 0.0
    %1418 = vmatpush1.msra.mxu0 0.0
    %1419 = vmatprep.subr.mxu0 0.0
    %1420 = vmatpush1.msra.mxu0 0.0
    %1421 = vmatprep.subr.mxu0 0.0
    %1422 = vmatpush1.msra.mxu0 0.0
    %1423 = vmatprep.subr.mxu0 0.0
    %1424 = vmatpush1.msra.mxu0 0.0
    %1425 = vmatprep.subr.mxu0 0.0
    %1426 = vmatpush1.msra.mxu0 0.0
    %1427 = vmatprep.subr.mxu0 0.0
    %1428 = vmatpush1.msra.mxu0 0.0
    %1429 = vmatprep.subr.mxu0 0.0
    %1430 = vmatpush1.msra.mxu0 0.0
    %1431 = vmatprep.subr.mxu0 0.0
    %1432 = vmatpush1.msra.mxu0 0.0
    %1433 = vmatprep.subr.mxu0 0.0
    %1434 = vmatpush1.msra.mxu0 0.0
    %1435 = vmatprep.subr.mxu0 0.0
    %1436 = vmatpush1.msra.mxu0 0.0
    %1437 = vmatprep.subr.mxu0 0.0
    %1438 = vmatpush1.msra.mxu0 0.0
    %1439 = vmatprep.subr.mxu0 0.0
    %1440 = vmatpush1.msra.mxu0 0.0
    %1441 = vmatprep.subr.mxu0 0.0
    %1442 = vmatpush1.msra.mxu0 0.0
    %1443 = vmatprep.subr.mxu0 0.0
    %1444 = vmatpush1.msra.mxu0 0.0
    %1445 = vmatprep.subr.mxu0 0.0
    %1446 = vmatpush1.msra.mxu0 0.0
    %1447 = vmatprep.subr.mxu0 0.0
    %1448 = vmatpush1.msra.mxu0 0.0
    %1449 = vmatprep.subr.mxu0 0.0
    %1450 = vmatpush1.msra.mxu0 0.0
    %1451 = vmatprep.subr.mxu0 0.0
    %1452 = vmatpush1.msra.mxu0 0.0
    %1453 = vmatprep.subr.mxu0 0.0
    %1454 = vmatpush1.msra.mxu0 0.0
    %1455 = vmatprep.subr.mxu0 0.0
    %1456 = vmatpush1.msra.mxu0 0.0
    %1457 = vmatprep.subr.mxu0 0.0
    %1458 = vmatpush1.msra.mxu0 0.0
    %1459 = vmatprep.subr.mxu0 0.0
    %1460 = vmatpush1.msra.mxu0 0.0
    %1461 = vmatprep.subr.mxu0 0.0
    %1462 = vmatpush1.msra.mxu0 0.0
    %1463 = vmatprep.mubr.f32.mxu0 0.0
    %1464 = vmatmul.mubr.f32.gmra.mrb[0].mxu0 %v1397
    %v1465 = vpop.f32.mrb[0].mxu0
    %v1466 = vadd.f32 0.0, %v1465
    %v1467 = vpop.f32.mrb[0].mxu0
    %1468 = vdwg.mxu0
    %v1469 = vadd.f32 %v1391, %v1466
    %v1470 = vxor.u32 %v1469, 2147483648
    %v1471 = vmul.f32 %v1470, 1.442695
    %v1472 = vpow.pop %v1471
    %v1473 = vadd.f32 %v1472, 1.0
    %v1474 = vrcp.pop %v1473
    %v1475 = vmul.f32 1.0, %v1474
    %v1476 = vadd.f32 %v1466, %v235
    %1478 = vrot.lane.b32.xlu0 %v1476, 112
    %v1479 = vpop.permute.xlu0 %1478
    %v1481 = vmul.f32 %v1475, %v1479
    %1483 = vrot.lane.b32.xlu0 %v1481, 16
    %v1484 = vpop.permute.xlu0 %1483
    %v1486 = vadd.f32 %v1391, %v1484
    %v1487 = vtanh.pop %v1486
    %v1488 = vsub.f32 1.0, %v1475
    %1490 = vrot.lane.b32.xlu0 %v1487, 120
    %v1491 = vpop.permute.xlu0 %1490
    %v1493 = vmul.f32 %v1488, %v1491
    %v1494 = vmul.f32 %v1475, %v1318
    %v1495 = vadd.f32 %v1493, %v1494
    %v1496 = vld [vmem:[%s5] sm:$0xff]
    %v1497 = vld [vmem:[%s5 + $0x8] sm:$0xff]
    %v1498 = vld [vmem:[%s5 + $0x10] sm:$0xff]
    %v1499 = vld [vmem:[%s5 + $0x18] sm:$0xff]
    %v1500 = vld [vmem:[%s5 + $0x20] sm:$0xff]
    %v1501 = vld [vmem:[%s5 + $0x28] sm:$0xff]
    %v1502 = vld [vmem:[%s5 + $0x30] sm:$0xff]
    %v1503 = vld [vmem:[%s5 + $0x38] sm:$0xff]
    %v1504 = vld [vmem:[%s5 + $0x40] sm:$0x3]
    %v1505 = vld [vmem:[%s6] sm:$0x1]
    %v1507 = vlaneseq
    %v1508 = vshrl.u32 %v1507, 7
    %v1509 = vsub.s32 0, %v1508
    %v1510 = vrot.slane %v1505, %v1509
    %v1513 = vsel %vm74, %v1504, 0
    %1515 = vmatprep.subr.mxu0 0.0
    %1516 = vmatpush1.msra.mxu0 %v1496
    %1517 = vmatprep.subr.mxu0 0.0
    %1518 = vmatpush1.msra.mxu0 %v1497
    %1519 = vmatprep.subr.mxu0 0.0
    %1520 = vmatpush1.msra.mxu0 %v1498
    %1521 = vmatprep.subr.mxu0 0.0
    %1522 = vmatpush1.msra.mxu0 %v1499
    %1523 = vmatprep.subr.mxu0 0.0
    %1524 = vmatpush1.msra.mxu0 %v1500
    %1525 = vmatprep.subr.mxu0 0.0
    %1526 = vmatpush1.msra.mxu0 %v1501
    %1527 = vmatprep.subr.mxu0 0.0
    %1528 = vmatpush1.msra.mxu0 %v1502
    %1529 = vmatprep.subr.mxu0 0.0
    %1530 = vmatpush1.msra.mxu0 %v1503
    %1531 = vmatprep.subr.mxu0 0.0
    %1532 = vmatpush1.msra.mxu0 %v1513
    %1533 = vmatprep.subr.mxu0 0.0
    %1534 = vmatpush1.msra.mxu0 0.0
    %1535 = vmatprep.subr.mxu0 0.0
    %1536 = vmatpush1.msra.mxu0 0.0
    %1537 = vmatprep.subr.mxu0 0.0
    %1538 = vmatpush1.msra.mxu0 0.0
    %1539 = vmatprep.subr.mxu0 0.0
    %1540 = vmatpush1.msra.mxu0 0.0
    %1541 = vmatprep.subr.mxu0 0.0
    %1542 = vmatpush1.msra.mxu0 0.0
    %1543 = vmatprep.subr.mxu0 0.0
    %1544 = vmatpush1.msra.mxu0 0.0
    %1545 = vmatprep.subr.mxu0 0.0
    %1546 = vmatpush1.msra.mxu0 0.0
    %1547 = vmatprep.subr.mxu0 0.0
    %1548 = vmatpush1.msra.mxu0 0.0
    %1549 = vmatprep.subr.mxu0 0.0
    %1550 = vmatpush1.msra.mxu0 0.0
    %1551 = vmatprep.subr.mxu0 0.0
    %1552 = vmatpush1.msra.mxu0 0.0
    %1553 = vmatprep.subr.mxu0 0.0
    %1554 = vmatpush1.msra.mxu0 0.0
    %1555 = vmatprep.subr.mxu0 0.0
    %1556 = vmatpush1.msra.mxu0 0.0
    %1557 = vmatprep.subr.mxu0 0.0
    %1558 = vmatpush1.msra.mxu0 0.0
    %1559 = vmatprep.subr.mxu0 0.0
    %1560 = vmatpush1.msra.mxu0 0.0
    %1561 = vmatprep.subr.mxu0 0.0
    %1562 = vmatpush1.msra.mxu0 0.0
    %1563 = vmatprep.subr.mxu0 0.0
    %1564 = vmatpush1.msra.mxu0 0.0
    %1565 = vmatprep.subr.mxu0 0.0
    %1566 = vmatpush1.msra.mxu0 0.0
    %1567 = vmatprep.subr.mxu0 0.0
    %1568 = vmatpush1.msra.mxu0 0.0
    %1569 = vmatprep.subr.mxu0 0.0
    %1570 = vmatpush1.msra.mxu0 0.0
    %1571 = vmatprep.subr.mxu0 0.0
    %1572 = vmatpush1.msra.mxu0 0.0
    %1573 = vmatprep.subr.mxu0 0.0
    %1574 = vmatpush1.msra.mxu0 0.0
    %1575 = vmatprep.subr.mxu0 0.0
    %1576 = vmatpush1.msra.mxu0 0.0
    %1577 = vmatprep.subr.mxu0 0.0
    %1578 = vmatpush1.msra.mxu0 0.0
    %1579 = vmatprep.mubr.f32.mxu0 0.0
    %1580 = vmatmul.mubr.f32.gmra.mrb[0].mxu0 %v1322
    %v1581 = vpop.f32.mrb[0].mxu0
    %v1582 = vadd.f32 %v1510, %v1581
    %v1583 = vpop.f32.mrb[0].mxu0
    %1584 = vdwg.mxu0
    %v1585 = vxor.u32 %v1582, 2147483648
    %v1586 = vmul.f32 %v1585, 1.442695
    %v1587 = vpow.pop %v1586
    %v1588 = vadd.f32 %v1587, 1.0
    %v1589 = vrcp.pop %v1588
    %v1590 = vmul.f32 1.0, %v1589
    %v1591 = vld [vmem:[%s7] sm:$0x1]
    %v1593 = vlaneseq
    %v1594 = vshrl.u32 %v1593, 7
    %v1595 = vsub.s32 0, %v1594
    %v1596 = vrot.slane %v1591, %v1595
    %v1598 = vmul.f32 %v1590, %v1596
    %1600 = vrot.lane.b32.xlu0 %v1598, 16
    %v1601 = vpop.permute.xlu0 %1600
    %v1603 = vadd.f32 %v1582, %v1601
    %v1604 = vtanh.pop %v1603
    %v1605 = vsub.f32 1.0, %v1590
    %1607 = vrot.lane.b32.xlu0 %v1604, 120
    %v1608 = vpop.permute.xlu0 %1607
    %v1610 = vmul.f32 %v1605, %v1608
    %v1611 = vld [vmem:[%s8] sm:$0xff]
    %v1612 = vld [vmem:[%s9] sm:$0xff]
    %1614 = vrot.lane.b32.xlu0 %v1610, 120
    %v1615 = vpop.permute.xlu0 %1614
    %v1616 = vsel %vm148, %v1615, 0
    %1618 = vmatprep.subr.mxu0 0.0
    %1619 = vmatpush1.msra.mxu0 %v1612
    %1620 = vmatprep.subr.mxu0 0.0
    %1621 = vmatpush1.msra.mxu0 0.0
    %1622 = vmatprep.subr.mxu0 0.0
    %1623 = vmatpush1.msra.mxu0 0.0
    %1624 = vmatprep.subr.mxu0 0.0
    %1625 = vmatpush1.msra.mxu0 0.0
    %1626 = vmatprep.subr.mxu0 0.0
    %1627 = vmatpush1.msra.mxu0 0.0
    %1628 = vmatprep.subr.mxu0 0.0
    %1629 = vmatpush1.msra.mxu0 0.0
    %1630 = vmatprep.subr.mxu0 0.0
    %1631 = vmatpush1.msra.mxu0 0.0
    %1632 = vmatprep.subr.mxu0 0.0
    %1633 = vmatpush1.msra.mxu0 0.0
    %1634 = vmatprep.subr.mxu0 0.0
    %1635 = vmatpush1.msra.mxu0 0.0
    %1636 = vmatprep.subr.mxu0 0.0
    %1637 = vmatpush1.msra.mxu0 0.0
    %1638 = vmatprep.subr.mxu0 0.0
    %1639 = vmatpush1.msra.mxu0 0.0
    %1640 = vmatprep.subr.mxu0 0.0
    %1641 = vmatpush1.msra.mxu0 0.0
    %1642 = vmatprep.subr.mxu0 0.0
    %1643 = vmatpush1.msra.mxu0 0.0
    %1644 = vmatprep.subr.mxu0 0.0
    %1645 = vmatpush1.msra.mxu0 0.0
    %1646 = vmatprep.subr.mxu0 0.0
    %1647 = vmatpush1.msra.mxu0 0.0
    %1648 = vmatprep.subr.mxu0 0.0
    %1649 = vmatpush1.msra.mxu0 0.0
    %1650 = vmatprep.subr.mxu0 0.0
    %1651 = vmatpush1.msra.mxu0 0.0
    %1652 = vmatprep.subr.mxu0 0.0
    %1653 = vmatpush1.msra.mxu0 0.0
    %1654 = vmatprep.subr.mxu0 0.0
    %1655 = vmatpush1.msra.mxu0 0.0
    %1656 = vmatprep.subr.mxu0 0.0
    %1657 = vmatpush1.msra.mxu0 0.0
    %1658 = vmatprep.subr.mxu0 0.0
    %1659 = vmatpush1.msra.mxu0 0.0
    %1660 = vmatprep.subr.mxu0 0.0
    %1661 = vmatpush1.msra.mxu0 0.0
    %1662 = vmatprep.subr.mxu0 0.0
    %1663 = vmatpush1.msra.mxu0 0.0
    %1664 = vmatprep.subr.mxu0 0.0
    %1665 = vmatpush1.msra.mxu0 0.0
    %1666 = vmatprep.subr.mxu0 0.0
    %1667 = vmatpush1.msra.mxu0 0.0
    %1668 = vmatprep.subr.mxu0 0.0
    %1669 = vmatpush1.msra.mxu0 0.0
    %1670 = vmatprep.subr.mxu0 0.0
    %1671 = vmatpush1.msra.mxu0 0.0
    %1672 = vmatprep.subr.mxu0 0.0
    %1673 = vmatpush1.msra.mxu0 0.0
    %1674 = vmatprep.subr.mxu0 0.0
    %1675 = vmatpush1.msra.mxu0 0.0
    %1676 = vmatprep.subr.mxu0 0.0
    %1677 = vmatpush1.msra.mxu0 0.0
    %1678 = vmatprep.subr.mxu0 0.0
    %1679 = vmatpush1.msra.mxu0 0.0
    %1680 = vmatprep.subr.mxu0 0.0
    %1681 = vmatpush1.msra.mxu0 0.0
    %1682 = vmatprep.mubr.f32.mxu0 0.0
    %1683 = vmatmul.mubr.f32.gmra.mrb[0].mxu0 %v1616
    %v1684 = vpop.f32.mrb[0].mxu0
    %v1685 = vadd.f32 0.0, %v1684
    %v1686 = vpop.f32.mrb[0].mxu0
    %1687 = vdwg.mxu0
    %1689 = vrot.lane.b32.xlu0 %v1495, 120
    %v1690 = vpop.permute.xlu0 %1689
    %v1691 = vsel %vm148, %v1690, 0
    %1693 = vmatprep.subr.mxu0 0.0
    %1694 = vmatpush1.msra.mxu0 %v1611
    %1695 = vmatprep.subr.mxu0 0.0
    %1696 = vmatpush1.msra.mxu0 0.0
    %1697 = vmatprep.subr.mxu0 0.0
    %1698 = vmatpush1.msra.mxu0 0.0
    %1699 = vmatprep.subr.mxu0 0.0
    %1700 = vmatpush1.msra.mxu0 0.0
    %1701 = vmatprep.subr.mxu0 0.0
    %1702 = vmatpush1.msra.mxu0 0.0
    %1703 = vmatprep.subr.mxu0 0.0
    %1704 = vmatpush1.msra.mxu0 0.0
    %1705 = vmatprep.subr.mxu0 0.0
    %1706 = vmatpush1.msra.mxu0 0.0
    %1707 = vmatprep.subr.mxu0 0.0
    %1708 = vmatpush1.msra.mxu0 0.0
    %1709 = vmatprep.subr.mxu0 0.0
    %1710 = vmatpush1.msra.mxu0 0.0
    %1711 = vmatprep.subr.mxu0 0.0
    %1712 = vmatpush1.msra.mxu0 0.0
    %1713 = vmatprep.subr.mxu0 0.0
    %1714 = vmatpush1.msra.mxu0 0.0
    %1715 = vmatprep.subr.mxu0 0.0
    %1716 = vmatpush1.msra.mxu0 0.0
    %1717 = vmatprep.subr.mxu0 0.0
    %1718 = vmatpush1.msra.mxu0 0.0
    %1719 = vmatprep.subr.mxu0 0.0
    %1720 = vmatpush1.msra.mxu0 0.0
    %1721 = vmatprep.subr.mxu0 0.0
    %1722 = vmatpush1.msra.mxu0 0.0
    %1723 = vmatprep.subr.mxu0 0.0
    %1724 = vmatpush1.msra.mxu0 0.0
    %1725 = vmatprep.subr.mxu0 0.0
    %1726 = vmatpush1.msra.mxu0 0.0
    %1727 = vmatprep.subr.mxu0 0.0
    %1728 = vmatpush1.msra.mxu0 0.0
    %1729 = vmatprep.subr.mxu0 0.0
    %1730 = vmatpush1.msra.mxu0 0.0
    %1731 = vmatprep.subr.mxu0 0.0
    %1732 = vmatpush1.msra.mxu0 0.0
    %1733 = vmatprep.subr.mxu0 0.0
    %1734 = vmatpush1.msra.mxu0 0.0
    %1735 = vmatprep.subr.mxu0 0.0
    %1736 = vmatpush1.msra.mxu0 0.0
    %1737 = vmatprep.subr.mxu0 0.0
    %1738 = vmatpush1.msra.mxu0 0.0
    %1739 = vmatprep.subr.mxu0 0.0
    %1740 = vmatpush1.msra.mxu0 0.0
    %1741 = vmatprep.subr.mxu0 0.0
    %1742 = vmatpush1.msra.mxu0 0.0
    %1743 = vmatprep.subr.mxu0 0.0
    %1744 = vmatpush1.msra.mxu0 0.0
    %1745 = vmatprep.subr.mxu0 0.0
    %1746 = vmatpush1.msra.mxu0 0.0
    %1747 = vmatprep.subr.mxu0 0.0
    %1748 = vmatpush1.msra.mxu0 0.0
    %1749 = vmatprep.subr.mxu0 0.0
    %1750 = vmatpush1.msra.mxu0 0.0
    %1751 = vmatprep.subr.mxu0 0.0
    %1752 = vmatpush1.msra.mxu0 0.0
    %1753 = vmatprep.subr.mxu0 0.0
    %1754 = vmatpush1.msra.mxu0 0.0
    %1755 = vmatprep.subr.mxu0 0.0
    %1756 = vmatpush1.msra.mxu0 0.0
    %1757 = vmatprep.mubr.f32.mxu0 0.0
    %1758 = vmatmul.mubr.f32.gmra.mrb[0].mxu0 %v1691
    %v1759 = vpop.f32.mrb[0].mxu0
    %v1760 = vadd.f32 %v1685, %v1759
    %v1761 = vpop.f32.mrb[0].mxu0
    %1762 = vdwg.mxu0
    %v1763 = vld [vmem:[%s10] sm:$0x1]
    %v1765 = vlaneseq
    %v1766 = vshrl.u32 %v1765, 7
    %v1767 = vsub.s32 0, %v1766
    %v1768 = vrot.slane %v1763, %v1767
    %v1770 = vadd.f32 %v1760, %v1768
    %v1771 = vmax.f32 %v1770, 0.0
    %v1772 = vld [vmem:[%s11] sm:$0xff]
    %v1773 = vld [vmem:[%s11 + $0x8] sm:$0xff]
    %v1774 = vld [vmem:[%s11 + $0x10] sm:$0xff]
    %v1775 = vld [vmem:[%s11 + $0x18] sm:$0xff]
    %v1776 = vld [vmem:[%s11 + $0x20] sm:$0xff]
    %v1777 = vld [vmem:[%s11 + $0x28] sm:$0xff]
    %v1778 = vld [vmem:[%s11 + $0x30] sm:$0xff]
    %v1779 = vld [vmem:[%s11 + $0x38] sm:$0xff]
    %v1780 = vld [vmem:[%s12] sm:$0x1]
    %v1782 = vlaneseq
    %v1783 = vshrl.u32 %v1782, 7
    %v1784 = vsub.s32 0, %v1783
    %v1785 = vrot.slane %v1780, %v1784
    %vm1787 = vcmask 523264
    %v1789 = vsel %vm1787, %v1771, 0
    %1791 = vmatprep.subr.mxu0 0.0
    %1792 = vmatpush1.msra.mxu0 %v1772
    %1793 = vmatprep.subr.mxu0 0.0
    %1794 = vmatpush1.msra.mxu0 %v1773
    %1795 = vmatprep.subr.mxu0 0.0
    %1796 = vmatpush1.msra.mxu0 %v1774
    %1797 = vmatprep.subr.mxu0 0.0
    %1798 = vmatpush1.msra.mxu0 %v1775
    %1799 = vmatprep.subr.mxu0 0.0
    %1800 = vmatpush1.msra.mxu0 %v1776
    %1801 = vmatprep.subr.mxu0 0.0
    %1802 = vmatpush1.msra.mxu0 %v1777
    %1803 = vmatprep.subr.mxu0 0.0
    %1804 = vmatpush1.msra.mxu0 %v1778
    %1805 = vmatprep.subr.mxu0 0.0
    %1806 = vmatpush1.msra.mxu0 %v1779
    %1807 = vmatprep.subr.mxu0 0.0
    %1808 = vmatpush1.msra.mxu0 0.0
    %1809 = vmatprep.subr.mxu0 0.0
    %1810 = vmatpush1.msra.mxu0 0.0
    %1811 = vmatprep.subr.mxu0 0.0
    %1812 = vmatpush1.msra.mxu0 0.0
    %1813 = vmatprep.subr.mxu0 0.0
    %1814 = vmatpush1.msra.mxu0 0.0
    %1815 = vmatprep.subr.mxu0 0.0
    %1816 = vmatpush1.msra.mxu0 0.0
    %1817 = vmatprep.subr.mxu0 0.0
    %1818 = vmatpush1.msra.mxu0 0.0
    %1819 = vmatprep.subr.mxu0 0.0
    %1820 = vmatpush1.msra.mxu0 0.0
    %1821 = vmatprep.subr.mxu0 0.0
    %1822 = vmatpush1.msra.mxu0 0.0
    %1823 = vmatprep.subr.mxu0 0.0
    %1824 = vmatpush1.msra.mxu0 0.0
    %1825 = vmatprep.subr.mxu0 0.0
    %1826 = vmatpush1.msra.mxu0 0.0
    %1827 = vmatprep.subr.mxu0 0.0
    %1828 = vmatpush1.msra.mxu0 0.0
    %1829 = vmatprep.subr.mxu0 0.0
    %1830 = vmatpush1.msra.mxu0 0.0
    %1831 = vmatprep.subr.mxu0 0.0
    %1832 = vmatpush1.msra.mxu0 0.0
    %1833 = vmatprep.subr.mxu0 0.0
    %1834 = vmatpush1.msra.mxu0 0.0
    %1835 = vmatprep.subr.mxu0 0.0
    %1836 = vmatpush1.msra.mxu0 0.0
    %1837 = vmatprep.subr.mxu0 0.0
    %1838 = vmatpush1.msra.mxu0 0.0
    %1839 = vmatprep.subr.mxu0 0.0
    %1840 = vmatpush1.msra.mxu0 0.0
    %1841 = vmatprep.subr.mxu0 0.0
    %1842 = vmatpush1.msra.mxu0 0.0
    %1843 = vmatprep.subr.mxu0 0.0
    %1844 = vmatpush1.msra.mxu0 0.0
    %1845 = vmatprep.subr.mxu0 0.0
    %1846 = vmatpush1.msra.mxu0 0.0
    %1847 = vmatprep.subr.mxu0 0.0
    %1848 = vmatpush1.msra.mxu0 0.0
    %1849 = vmatprep.subr.mxu0 0.0
    %1850 = vmatpush1.msra.mxu0 0.0
    %1851 = vmatprep.subr.mxu0 0.0
    %1852 = vmatpush1.msra.mxu0 0.0
    %1853 = vmatprep.subr.mxu0 0.0
    %1854 = vmatpush1.msra.mxu0 0.0
    %1855 = vmatprep.mubr.f32.mxu0 0.0
    %1856 = vmatmul.mubr.f32.gmra.mrb[0].mxu0 %v1789
    %v1857 = vpop.f32.mrb[0].mxu0
    %v1858 = vadd.f32 %v1785, %v1857
    %v1859 = vpop.f32.mrb[0].mxu0
    %1860 = vdwg.mxu0
    %v1861 = vmax.f32 %v1858, 0.0
    %v1862 = vld [vmem:[%s13] sm:$0xff]
    %v1863 = vld [vmem:[%s13 + $0x8] sm:$0xff]
    %v1864 = vld [vmem:[%s13 + $0x10] sm:$0xff]
    %v1865 = vld [vmem:[%s13 + $0x18] sm:$0xff]
    %v1866 = vld [vmem:[%s13 + $0x20] sm:$0xff]
    %v1867 = vld [vmem:[%s13 + $0x28] sm:$0xff]
    %v1868 = vld [vmem:[%s13 + $0x30] sm:$0xff]
    %v1869 = vld [vmem:[%s13 + $0x38] sm:$0xff]
    %v1870 = vld [vmem:[%s14] sm:$0x1]
    %v1872 = vlaneseq
    %v1873 = vshrl.u32 %v1872, 7
    %v1874 = vsub.s32 0, %v1873
    %v1875 = vrot.slane %v1870, %v1874
    %v1878 = vsel %vm1787, %v1861, 0
    %1880 = vmatprep.subr.mxu0 0.0
    %1881 = vmatpush1.msra.mxu0 %v1862
    %1882 = vmatprep.subr.mxu0 0.0
    %1883 = vmatpush1.msra.mxu0 %v1863
    %1884 = vmatprep.subr.mxu0 0.0
    %1885 = vmatpush1.msra.mxu0 %v1864
    %1886 = vmatprep.subr.mxu0 0.0
    %1887 = vmatpush1.msra.mxu0 %v1865
    %1888 = vmatprep.subr.mxu0 0.0
    %1889 = vmatpush1.msra.mxu0 %v1866
    %1890 = vmatprep.subr.mxu0 0.0
    %1891 = vmatpush1.msra.mxu0 %v1867
    %1892 = vmatprep.subr.mxu0 0.0
    %1893 = vmatpush1.msra.mxu0 %v1868
    %1894 = vmatprep.subr.mxu0 0.0
    %1895 = vmatpush1.msra.mxu0 %v1869
    %1896 = vmatprep.subr.mxu0 0.0
    %1897 = vmatpush1.msra.mxu0 0.0
    %1898 = vmatprep.subr.mxu0 0.0
    %1899 = vmatpush1.msra.mxu0 0.0
    %1900 = vmatprep.subr.mxu0 0.0
    %1901 = vmatpush1.msra.mxu0 0.0
    %1902 = vmatprep.subr.mxu0 0.0
    %1903 = vmatpush1.msra.mxu0 0.0
    %1904 = vmatprep.subr.mxu0 0.0
    %1905 = vmatpush1.msra.mxu0 0.0
    %1906 = vmatprep.subr.mxu0 0.0
    %1907 = vmatpush1.msra.mxu0 0.0
    %1908 = vmatprep.subr.mxu0 0.0
    %1909 = vmatpush1.msra.mxu0 0.0
    %1910 = vmatprep.subr.mxu0 0.0
    %1911 = vmatpush1.msra.mxu0 0.0
    %1912 = vmatprep.subr.mxu0 0.0
    %1913 = vmatpush1.msra.mxu0 0.0
    %1914 = vmatprep.subr.mxu0 0.0
    %1915 = vmatpush1.msra.mxu0 0.0
    %1916 = vmatprep.subr.mxu0 0.0
    %1917 = vmatpush1.msra.mxu0 0.0
    %1918 = vmatprep.subr.mxu0 0.0
    %1919 = vmatpush1.msra.mxu0 0.0
    %1920 = vmatprep.subr.mxu0 0.0
    %1921 = vmatpush1.msra.mxu0 0.0
    %1922 = vmatprep.subr.mxu0 0.0
    %1923 = vmatpush1.msra.mxu0 0.0
    %1924 = vmatprep.subr.mxu0 0.0
    %1925 = vmatpush1.msra.mxu0 0.0
    %1926 = vmatprep.subr.mxu0 0.0
    %1927 = vmatpush1.msra.mxu0 0.0
    %1928 = vmatprep.subr.mxu0 0.0
    %1929 = vmatpush1.msra.mxu0 0.0
    %1930 = vmatprep.subr.mxu0 0.0
    %1931 = vmatpush1.msra.mxu0 0.0
    %1932 = vmatprep.subr.mxu0 0.0
    %1933 = vmatpush1.msra.mxu0 0.0
    %1934 = vmatprep.subr.mxu0 0.0
    %1935 = vmatpush1.msra.mxu0 0.0
    %1936 = vmatprep.subr.mxu0 0.0
    %1937 = vmatpush1.msra.mxu0 0.0
    %1938 = vmatprep.subr.mxu0 0.0
    %1939 = vmatpush1.msra.mxu0 0.0
    %1940 = vmatprep.subr.mxu0 0.0
    %1941 = vmatpush1.msra.mxu0 0.0
    %1942 = vmatprep.subr.mxu0 0.0
    %1943 = vmatpush1.msra.mxu0 0.0
    %1944 = vmatprep.mubr.f32.mxu0 0.0
    %1945 = vmatmul.mubr.f32.gmra.mrb[0].mxu0 %v1878
    %v1946 = vpop.f32.mrb[0].mxu0
    %v1947 = vadd.f32 %v1875, %v1946
    %v1948 = vpop.f32.mrb[0].mxu0
    %1949 = vdwg.mxu0
    %1950 = vst [vmem:[#allocation2] sm:$0x3] %v1947
    // Predicated region
    $region62: #{tpu_custom_call.1} parent=1 // pred_check
      _
    $region63: #{tpu_custom_call.1} parent=1 // pred_check_branch
      %1952 = sbr.rel (0) target = $region65
    $region64: #{tpu_custom_call.1} parent=1 // pred_region
      %s1954 = ssub.s32 32, 32
      %1955 = vsyncadd [#allocation3], %s1954
      %s1957 = sshll.u32 [#allocation2], 4
      %s1958 = int_to_ptr.vmem [resolvable:$true] %s1957
      %1960 = dma.vmem_to_hbm [thread:$0]  %s1958, 32, %s15, [#allocation3]
    $region65: #{tpu_custom_call.1} parent=1 // pred_fallthru
      _
    // Predicated region
    $region66: #{tpu_custom_call.1} parent=1 // pred_check
      _
    $region67: #{tpu_custom_call.1} parent=1 // pred_check_branch
      %1962 = sbr.rel (0) target = $region69
    $region68: #{tpu_custom_call.1} parent=1 // pred_region
      %1963 = dma.done [#allocation3], 32
    $region69: #{tpu_custom_call.1} parent=1 // pred_fallthru
      _
    %1964 = vsyncpa [#allocation3], 1

</llo_original>
